<compile_context>
chip_gen: v7x
topology: tpu7x:2x2x1
jax: 0.10.0
libtpu: 0.0.40
codegen_flags: <defaults>
</compile_context>

<pallas_src>
import functools
import math

import jax
import jax.numpy as jnp
from jax import lax
from jax.experimental import pallas as pl
from jax.experimental.pallas import tpu as pltpu

MIN_STD = 0.05
LOG_SIG_MIN = math.log(MIN_STD)
LOG_SIG_MAX = -math.log(1e-5)


def lstm_net_kernel(x_ref, wih_ref, whh_ref, b_ref, whead_ref, bhead_ref,
                    out_ref, hs_sc, *, T, B):
    """Whole-sequence LSTM + fused mean/log_sigma heads in one kernel invocation."""
    H = whh_ref.shape[0]

    # --- Batched input projection + bias: one MXU pass, off the serial path.
    # x: (T*B, Din) @ (Din, 4H) -> (T*B, 4H); bias broadcast happens once here.
    gx = (jnp.dot(x_ref[...], wih_ref[...], preferred_element_type=jnp.float32)
          + b_ref[...])

    whh = whh_ref[...]                              # (H, 4H), resident across the loop

    # --- Fully unrolled recurrence; h/c carried in vregs (no per-step VMEM ld/st).
    h = jnp.zeros((B, H), jnp.float32)
    c = jnp.zeros((B, H), jnp.float32)
    for t in range(T):                              # static unroll, static slices
        gates = gx[t * B:(t + 1) * B, :] + jnp.dot(
            h, whh, preferred_element_type=jnp.float32)        # (B, 4H)
        # PyTorch gate order: i, f, g, o
        i_g = jax.nn.sigmoid(gates[:, 0 * H:1 * H])
        f_g = jax.nn.sigmoid(gates[:, 1 * H:2 * H])
        g_g = jnp.tanh(gates[:, 2 * H:3 * H])
        o_g = jax.nn.sigmoid(gates[:, 3 * H:4 * H])
        c = f_g * c + i_g * g_g
        h = o_g * jnp.tanh(c)
        hs_sc[t * B:(t + 1) * B, :] = h             # static row store into the stash

    # --- Fused output heads: one (T*B, H) x (H, 2) matmul + single writeback.
    heads = (jnp.dot(hs_sc[...], whead_ref[...], preferred_element_type=jnp.float32)
             + bhead_ref[...])                      # col 0 = mean, col 1 = log_sigma
    col = lax.broadcasted_iota(jnp.int32, heads.shape, 1)
    heads = jnp.where(col == 1, jnp.clip(heads, LOG_SIG_MIN, LOG_SIG_MAX), heads)
    out_ref[...] = heads.astype(out_ref.dtype)


def lstm_net_forward(x, params):
    """x: (B, T, input_size) batch-first, like the PyTorch module. Returns (mean, log_sigma), each (B, T)."""
    B, T, Din = x.shape
    H = params["whh"].shape[1]

    # Time-major, flattened to (T*B, Din): lets the kernel do one batched input
    # projection and address timesteps with purely static row slices.
    x2d = jnp.transpose(x, (1, 0, 2)).reshape(T * B, Din)
    wih_t = params["wih"].T                                   # (Din, 4H)
    whh_t = params["whh"].T                                   # (H, 4H)
    b = (params["bih"] + params["bhh"]).reshape(1, 4 * H)     # (1, 4H) combined bias
    whead = jnp.concatenate([params["wmean"], params["wstd"]], axis=0).T   # (H, 2)
    bhead = jnp.concatenate([params["bmean"], params["bstd"]]).reshape(1, 2)

    full = lambda shape: pl.BlockSpec(shape, lambda i: tuple(0 for _ in shape))

    out = pl.pallas_call(
        functools.partial(lstm_net_kernel, T=T, B=B),
        out_shape=jax.ShapeDtypeStruct((T * B, 2), jnp.float32),
        grid_spec=pltpu.PrefetchScalarGridSpec(
            num_scalar_prefetch=0,
            grid=(1,),                                # single invocation; time loop is in-kernel
            in_specs=[
                full((T * B, Din)),                   # whole sequence, VMEM-resident
                full((Din, 4 * H)),                   # W_ih^T
                full((H, 4 * H)),                     # W_hh^T
                full((1, 4 * H)),                     # combined bias
                full((H, 2)),                         # fused [wmean | wstd] head weight
                full((1, 2)),                         # fused head bias
            ],
            out_specs=full((T * B, 2)),
            scratch_shapes=[
                pltpu.VMEM((T * B, H), jnp.float32),  # h_t stash for the fused heads
            ],
        ),
        compiler_params=pltpu.CompilerParams(
            dimension_semantics=("arbitrary",),
        ),
    )(x2d, wih_t, whh_t, b, whead, bhead)

    out = out.reshape(T, B, 2)
    mean = jnp.transpose(out[..., 0])        # (B, T)  == .squeeze(2)
    log_sigma = jnp.transpose(out[..., 1])   # (B, T)
    return mean, log_sigma


def lstm_net_reference(x, params):
    """Pure-JAX reference (lax.scan) for correctness checking."""
    B, T, Din = x.shape
    H = params["whh"].shape[1]
    wih_t, whh_t = params["wih"].T, params["whh"].T
    b = params["bih"] + params["bhh"]

    def step(carry, x_t):
        h, c = carry
        gates = x_t @ wih_t + h @ whh_t + b
        i_g = jax.nn.sigmoid(gates[:, 0 * H:1 * H])
        f_g = jax.nn.sigmoid(gates[:, 1 * H:2 * H])
        g_g = jnp.tanh(gates[:, 2 * H:3 * H])
        o_g = jax.nn.sigmoid(gates[:, 3 * H:4 * H])
        c_new = f_g * c + i_g * g_g
        h_new = o_g * jnp.tanh(c_new)
        return (h_new, c_new), h_new

    init = (jnp.zeros((B, H), jnp.float32), jnp.zeros((B, H), jnp.float32))
    _, outs = lax.scan(step, init, jnp.transpose(x, (1, 0, 2)))   # (T, B, H)
    outs = jnp.transpose(outs, (1, 0, 2))                         # (B, T, H)
    mean = (outs @ params["wmean"].T + params["bmean"])[..., 0]
    lsig = (outs @ params["wstd"].T + params["bstd"])[..., 0]
    lsig = jnp.clip(lsig, LOG_SIG_MIN, LOG_SIG_MAX)
    return mean, lsig


def init_params(key, input_size, hidden_size):
    """Deterministic init mirroring PyTorch LSTM/Linear uniform(-1/sqrt(H), 1/sqrt(H))."""
    H, Din = hidden_size, input_size
    ks = jax.random.split(key, 8)
    bd = 1.0 / math.sqrt(H)
    u = lambda k, shape: jax.random.uniform(k, shape, jnp.float32, -bd, bd)
    return {
        "wih": u(ks[0], (4 * H, Din)),
        "whh": u(ks[1], (4 * H, H)),
        "bih": u(ks[2], (4 * H,)),
        "bhh": u(ks[3], (4 * H,)),
        "wmean": u(ks[4], (1, H)),
        "bmean": u(ks[5], (1,)),
        "wstd": u(ks[6], (1, H)),
        "bstd": u(ks[7], (1,)),
    }


if __name__ == "__main__":
    B, T, INPUT_SIZE, HIDDEN_SIZE = 2, 8, 8, 32

    key = jax.random.PRNGKey(0)
    k_x, k_p = jax.random.split(key)
    x = jax.random.normal(k_x, (B, T, INPUT_SIZE), dtype=jnp.float32)
    params = init_params(k_p, INPUT_SIZE, HIDDEN_SIZE)

    mean, log_sigma = jax.block_until_ready(lstm_net_forward(x, params))
    mean_ref, lsig_ref = jax.block_until_ready(lstm_net_reference(x, params))

    assert mean.shape == (B, T) and log_sigma.shape == (B, T)
    assert jnp.allclose(mean, mean_ref, atol=1e-4, rtol=1e-4)
    assert jnp.allclose(log_sigma, lsig_ref, atol=1e-4, rtol=1e-4)

    print("KERNEL_OK")
</pallas_src>

<mosaic_0001>
module attributes {stable_mosaic.version = 11 : i64} {
  func.func @lstm_net_kernel(%arg0: i32, %arg1: memref<16x8xf32, #tpu.memory_space<vmem>>, %arg2: memref<8x128xf32, #tpu.memory_space<vmem>>, %arg3: memref<32x128xf32, #tpu.memory_space<vmem>>, %arg4: memref<1x128xf32, #tpu.memory_space<vmem>>, %arg5: memref<32x2xf32, #tpu.memory_space<vmem>>, %arg6: memref<1x2xf32, #tpu.memory_space<vmem>>, %arg7: memref<16x2xf32, #tpu.memory_space<vmem>>, %arg8: memref<16x32xf32, #tpu.memory_space<vmem>>) attributes {dimension_semantics = [#tpu.dimension_semantics<arbitrary>], iteration_bounds = array<i64: 1>, scalar_prefetch = 0 : i64, scratch_operands = 1 : i64, tpu.core_type = #tpu.core_type<tc>, window_params = [{pipeline_mode = #tpu.pipeline_mode<synchronous>, transform_indices = @transform_0, window_bounds = array<i64: 16, 8>}, {pipeline_mode = #tpu.pipeline_mode<synchronous>, transform_indices = @transform_1, window_bounds = array<i64: 8, 128>}, {pipeline_mode = #tpu.pipeline_mode<synchronous>, transform_indices = @transform_2, window_bounds = array<i64: 32, 128>}, {pipeline_mode = #tpu.pipeline_mode<synchronous>, transform_indices = @transform_3, window_bounds = array<i64: 1, 128>}, {pipeline_mode = #tpu.pipeline_mode<synchronous>, transform_indices = @transform_4, window_bounds = array<i64: 32, 2>}, {pipeline_mode = #tpu.pipeline_mode<synchronous>, transform_indices = @transform_5, window_bounds = array<i64: 1, 2>}, {pipeline_mode = #tpu.pipeline_mode<synchronous>, transform_indices = @transform_6, window_bounds = array<i64: 16, 2>}]} {
    %c0 = arith.constant 0 : index
    %c0_0 = arith.constant 0 : index
    %0 = vector.load %arg1[%c0, %c0_0] : memref<16x8xf32, #tpu.memory_space<vmem>>, vector<16x8xf32>
    %c0_1 = arith.constant 0 : index
    %c0_2 = arith.constant 0 : index
    %1 = vector.load %arg2[%c0_1, %c0_2] : memref<8x128xf32, #tpu.memory_space<vmem>>, vector<8x128xf32>
    %cst = arith.constant dense<0.000000e+00> : vector<16x128xf32>
    %2 = tpu.matmul %0, %1, %cst {dimension_numbers = #tpu.dot_dimension_numbers<[1], [0], [0], [1], [0, 0, 1, 1], [], []>} : vector<16x8xf32>, vector<8x128xf32>, vector<16x128xf32> -> vector<16x128xf32>
    %c0_3 = arith.constant 0 : index
    %c0_4 = arith.constant 0 : index
    %3 = vector.load %arg4[%c0_3, %c0_4] : memref<1x128xf32, #tpu.memory_space<vmem>>, vector<1x128xf32>
    %4 = vector.broadcast %3 : vector<1x128xf32> to vector<16x128xf32>
    %5 = arith.addf %2, %4 : vector<16x128xf32>
    %c0_5 = arith.constant 0 : index
    %c0_6 = arith.constant 0 : index
    %6 = vector.load %arg3[%c0_5, %c0_6] : memref<32x128xf32, #tpu.memory_space<vmem>>, vector<32x128xf32>
    %cst_7 = arith.constant 0.000000e+00 : f32
    %7 = vector.broadcast %cst_7 : f32 to vector<2x32xf32>
    %cst_8 = arith.constant 0.000000e+00 : f32
    %8 = vector.broadcast %cst_8 : f32 to vector<2x32xf32>
    %9 = vector.extract_strided_slice %5 {offsets = [0, 0], sizes = [2, 128], strides = [1, 1]} : vector<16x128xf32> to vector<2x128xf32>
    %cst_9 = arith.constant dense<0.000000e+00> : vector<2x128xf32>
    %10 = tpu.matmul %7, %6, %cst_9 {dimension_numbers = #tpu.dot_dimension_numbers<[1], [0], [0], [1], [0, 0, 1, 1], [], []>} : vector<2x32xf32>, vector<32x128xf32>, vector<2x128xf32> -> vector<2x128xf32>
    %11 = arith.addf %9, %10 : vector<2x128xf32>
    %12 = vector.extract_strided_slice %11 {offsets = [0, 0], sizes = [2, 32], strides = [1, 1]} : vector<2x128xf32> to vector<2x32xf32>
    %13 = arith.negf %12 : vector<2x32xf32>
    %14 = math.exp %13 : vector<2x32xf32>
    %cst_10 = arith.constant 1.000000e+00 : f32
    %15 = vector.broadcast %cst_10 : f32 to vector<2x32xf32>
    %16 = arith.addf %15, %14 : vector<2x32xf32>
    %17 = arith.divf %15, %16 : vector<2x32xf32>
    %18 = vector.extract_strided_slice %11 {offsets = [0, 32], sizes = [2, 32], strides = [1, 1]} : vector<2x128xf32> to vector<2x32xf32>
    %19 = arith.negf %18 : vector<2x32xf32>
    %20 = math.exp %19 : vector<2x32xf32>
    %cst_11 = arith.constant 1.000000e+00 : f32
    %21 = vector.broadcast %cst_11 : f32 to vector<2x32xf32>
    %22 = arith.addf %21, %20 : vector<2x32xf32>
    %23 = arith.divf %21, %22 : vector<2x32xf32>
    %24 = vector.extract_strided_slice %11 {offsets = [0, 64], sizes = [2, 32], strides = [1, 1]} : vector<2x128xf32> to vector<2x32xf32>
    %25 = math.tanh %24 : vector<2x32xf32>
    %26 = vector.extract_strided_slice %11 {offsets = [0, 96], sizes = [2, 32], strides = [1, 1]} : vector<2x128xf32> to vector<2x32xf32>
    %27 = arith.negf %26 : vector<2x32xf32>
    %28 = math.exp %27 : vector<2x32xf32>
    %cst_12 = arith.constant 1.000000e+00 : f32
    %29 = vector.broadcast %cst_12 : f32 to vector<2x32xf32>
    %30 = arith.addf %29, %28 : vector<2x32xf32>
    %31 = arith.divf %29, %30 : vector<2x32xf32>
    %32 = arith.mulf %23, %8 : vector<2x32xf32>
    %33 = arith.mulf %17, %25 : vector<2x32xf32>
    %34 = arith.addf %32, %33 : vector<2x32xf32>
    %35 = math.tanh %34 : vector<2x32xf32>
    %36 = arith.mulf %31, %35 : vector<2x32xf32>
    %c0_13 = arith.constant 0 : index
    %c0_14 = arith.constant 0 : index
    %37 = vector.load %arg8[%c0_13, %c0_14] : memref<16x32xf32, #tpu.memory_space<vmem>>, vector<2x32xf32>
    tpu.vector_store %arg8[%c0_13, %c0_14], %36 {strides = array<i32>} : memref<16x32xf32, #tpu.memory_space<vmem>>, vector<2x32xf32>,
    %38 = vector.extract_strided_slice %5 {offsets = [2, 0], sizes = [2, 128], strides = [1, 1]} : vector<16x128xf32> to vector<2x128xf32>
    %cst_15 = arith.constant dense<0.000000e+00> : vector<2x128xf32>
    %39 = tpu.matmul %36, %6, %cst_15 {dimension_numbers = #tpu.dot_dimension_numbers<[1], [0], [0], [1], [0, 0, 1, 1], [], []>} : vector<2x32xf32>, vector<32x128xf32>, vector<2x128xf32> -> vector<2x128xf32>
    %40 = arith.addf %38, %39 : vector<2x128xf32>
    %41 = vector.extract_strided_slice %40 {offsets = [0, 0], sizes = [2, 32], strides = [1, 1]} : vector<2x128xf32> to vector<2x32xf32>
    %42 = arith.negf %41 : vector<2x32xf32>
    %43 = math.exp %42 : vector<2x32xf32>
    %cst_16 = arith.constant 1.000000e+00 : f32
    %44 = vector.broadcast %cst_16 : f32 to vector<2x32xf32>
    %45 = arith.addf %44, %43 : vector<2x32xf32>
    %46 = arith.divf %44, %45 : vector<2x32xf32>
    %47 = vector.extract_strided_slice %40 {offsets = [0, 32], sizes = [2, 32], strides = [1, 1]} : vector<2x128xf32> to vector<2x32xf32>
    %48 = arith.negf %47 : vector<2x32xf32>
    %49 = math.exp %48 : vector<2x32xf32>
    %cst_17 = arith.constant 1.000000e+00 : f32
    %50 = vector.broadcast %cst_17 : f32 to vector<2x32xf32>
    %51 = arith.addf %50, %49 : vector<2x32xf32>
    %52 = arith.divf %50, %51 : vector<2x32xf32>
    %53 = vector.extract_strided_slice %40 {offsets = [0, 64], sizes = [2, 32], strides = [1, 1]} : vector<2x128xf32> to vector<2x32xf32>
    %54 = math.tanh %53 : vector<2x32xf32>
    %55 = vector.extract_strided_slice %40 {offsets = [0, 96], sizes = [2, 32], strides = [1, 1]} : vector<2x128xf32> to vector<2x32xf32>
    %56 = arith.negf %55 : vector<2x32xf32>
    %57 = math.exp %56 : vector<2x32xf32>
    %cst_18 = arith.constant 1.000000e+00 : f32
    %58 = vector.broadcast %cst_18 : f32 to vector<2x32xf32>
    %59 = arith.addf %58, %57 : vector<2x32xf32>
    %60 = arith.divf %58, %59 : vector<2x32xf32>
    %61 = arith.mulf %52, %34 : vector<2x32xf32>
    %62 = arith.mulf %46, %54 : vector<2x32xf32>
    %63 = arith.addf %61, %62 : vector<2x32xf32>
    %64 = math.tanh %63 : vector<2x32xf32>
    %65 = arith.mulf %60, %64 : vector<2x32xf32>
    %c2 = arith.constant 2 : index
    %c0_19 = arith.constant 0 : index
    %66 = vector.load %arg8[%c2, %c0_19] : memref<16x32xf32, #tpu.memory_space<vmem>>, vector<2x32xf32>
    tpu.vector_store %arg8[%c2, %c0_19], %65 {strides = array<i32>} : memref<16x32xf32, #tpu.memory_space<vmem>>, vector<2x32xf32>,
    %67 = vector.extract_strided_slice %5 {offsets = [4, 0], sizes = [2, 128], strides = [1, 1]} : vector<16x128xf32> to vector<2x128xf32>
    %cst_20 = arith.constant dense<0.000000e+00> : vector<2x128xf32>
    %68 = tpu.matmul %65, %6, %cst_20 {dimension_numbers = #tpu.dot_dimension_numbers<[1], [0], [0], [1], [0, 0, 1, 1], [], []>} : vector<2x32xf32>, vector<32x128xf32>, vector<2x128xf32> -> vector<2x128xf32>
    %69 = arith.addf %67, %68 : vector<2x128xf32>
    %70 = vector.extract_strided_slice %69 {offsets = [0, 0], sizes = [2, 32], strides = [1, 1]} : vector<2x128xf32> to vector<2x32xf32>
    %71 = arith.negf %70 : vector<2x32xf32>
    %72 = math.exp %71 : vector<2x32xf32>
    %cst_21 = arith.constant 1.000000e+00 : f32
    %73 = vector.broadcast %cst_21 : f32 to vector<2x32xf32>
    %74 = arith.addf %73, %72 : vector<2x32xf32>
    %75 = arith.divf %73, %74 : vector<2x32xf32>
    %76 = vector.extract_strided_slice %69 {offsets = [0, 32], sizes = [2, 32], strides = [1, 1]} : vector<2x128xf32> to vector<2x32xf32>
    %77 = arith.negf %76 : vector<2x32xf32>
    %78 = math.exp %77 : vector<2x32xf32>
    %cst_22 = arith.constant 1.000000e+00 : f32
    %79 = vector.broadcast %cst_22 : f32 to vector<2x32xf32>
    %80 = arith.addf %79, %78 : vector<2x32xf32>
    %81 = arith.divf %79, %80 : vector<2x32xf32>
    %82 = vector.extract_strided_slice %69 {offsets = [0, 64], sizes = [2, 32], strides = [1, 1]} : vector<2x128xf32> to vector<2x32xf32>
    %83 = math.tanh %82 : vector<2x32xf32>
    %84 = vector.extract_strided_slice %69 {offsets = [0, 96], sizes = [2, 32], strides = [1, 1]} : vector<2x128xf32> to vector<2x32xf32>
    %85 = arith.negf %84 : vector<2x32xf32>
    %86 = math.exp %85 : vector<2x32xf32>
    %cst_23 = arith.constant 1.000000e+00 : f32
    %87 = vector.broadcast %cst_23 : f32 to vector<2x32xf32>
    %88 = arith.addf %87, %86 : vector<2x32xf32>
    %89 = arith.divf %87, %88 : vector<2x32xf32>
    %90 = arith.mulf %81, %63 : vector<2x32xf32>
    %91 = arith.mulf %75, %83 : vector<2x32xf32>
    %92 = arith.addf %90, %91 : vector<2x32xf32>
    %93 = math.tanh %92 : vector<2x32xf32>
    %94 = arith.mulf %89, %93 : vector<2x32xf32>
    %c4 = arith.constant 4 : index
    %c0_24 = arith.constant 0 : index
    %95 = vector.load %arg8[%c4, %c0_24] : memref<16x32xf32, #tpu.memory_space<vmem>>, vector<2x32xf32>
    tpu.vector_store %arg8[%c4, %c0_24], %94 {strides = array<i32>} : memref<16x32xf32, #tpu.memory_space<vmem>>, vector<2x32xf32>,
    %96 = vector.extract_strided_slice %5 {offsets = [6, 0], sizes = [2, 128], strides = [1, 1]} : vector<16x128xf32> to vector<2x128xf32>
    %cst_25 = arith.constant dense<0.000000e+00> : vector<2x128xf32>
    %97 = tpu.matmul %94, %6, %cst_25 {dimension_numbers = #tpu.dot_dimension_numbers<[1], [0], [0], [1], [0, 0, 1, 1], [], []>} : vector<2x32xf32>, vector<32x128xf32>, vector<2x128xf32> -> vector<2x128xf32>
    %98 = arith.addf %96, %97 : vector<2x128xf32>
    %99 = vector.extract_strided_slice %98 {offsets = [0, 0], sizes = [2, 32], strides = [1, 1]} : vector<2x128xf32> to vector<2x32xf32>
    %100 = arith.negf %99 : vector<2x32xf32>
    %101 = math.exp %100 : vector<2x32xf32>
    %cst_26 = arith.constant 1.000000e+00 : f32
    %102 = vector.broadcast %cst_26 : f32 to vector<2x32xf32>
    %103 = arith.addf %102, %101 : vector<2x32xf32>
    %104 = arith.divf %102, %103 : vector<2x32xf32>
    %105 = vector.extract_strided_slice %98 {offsets = [0, 32], sizes = [2, 32], strides = [1, 1]} : vector<2x128xf32> to vector<2x32xf32>
    %106 = arith.negf %105 : vector<2x32xf32>
    %107 = math.exp %106 : vector<2x32xf32>
    %cst_27 = arith.constant 1.000000e+00 : f32
    %108 = vector.broadcast %cst_27 : f32 to vector<2x32xf32>
    %109 = arith.addf %108, %107 : vector<2x32xf32>
    %110 = arith.divf %108, %109 : vector<2x32xf32>
    %111 = vector.extract_strided_slice %98 {offsets = [0, 64], sizes = [2, 32], strides = [1, 1]} : vector<2x128xf32> to vector<2x32xf32>
    %112 = math.tanh %111 : vector<2x32xf32>
    %113 = vector.extract_strided_slice %98 {offsets = [0, 96], sizes = [2, 32], strides = [1, 1]} : vector<2x128xf32> to vector<2x32xf32>
    %114 = arith.negf %113 : vector<2x32xf32>
    %115 = math.exp %114 : vector<2x32xf32>
    %cst_28 = arith.constant 1.000000e+00 : f32
    %116 = vector.broadcast %cst_28 : f32 to vector<2x32xf32>
    %117 = arith.addf %116, %115 : vector<2x32xf32>
    %118 = arith.divf %116, %117 : vector<2x32xf32>
    %119 = arith.mulf %110, %92 : vector<2x32xf32>
    %120 = arith.mulf %104, %112 : vector<2x32xf32>
    %121 = arith.addf %119, %120 : vector<2x32xf32>
    %122 = math.tanh %121 : vector<2x32xf32>
    %123 = arith.mulf %118, %122 : vector<2x32xf32>
    %c6 = arith.constant 6 : index
    %c0_29 = arith.constant 0 : index
    %124 = vector.load %arg8[%c6, %c0_29] : memref<16x32xf32, #tpu.memory_space<vmem>>, vector<2x32xf32>
    tpu.vector_store %arg8[%c6, %c0_29], %123 {strides = array<i32>} : memref<16x32xf32, #tpu.memory_space<vmem>>, vector<2x32xf32>,
    %125 = vector.extract_strided_slice %5 {offsets = [8, 0], sizes = [2, 128], strides = [1, 1]} : vector<16x128xf32> to vector<2x128xf32>
    %cst_30 = arith.constant dense<0.000000e+00> : vector<2x128xf32>
    %126 = tpu.matmul %123, %6, %cst_30 {dimension_numbers = #tpu.dot_dimension_numbers<[1], [0], [0], [1], [0, 0, 1, 1], [], []>} : vector<2x32xf32>, vector<32x128xf32>, vector<2x128xf32> -> vector<2x128xf32>
    %127 = arith.addf %125, %126 : vector<2x128xf32>
    %128 = vector.extract_strided_slice %127 {offsets = [0, 0], sizes = [2, 32], strides = [1, 1]} : vector<2x128xf32> to vector<2x32xf32>
    %129 = arith.negf %128 : vector<2x32xf32>
    %130 = math.exp %129 : vector<2x32xf32>
    %cst_31 = arith.constant 1.000000e+00 : f32
    %131 = vector.broadcast %cst_31 : f32 to vector<2x32xf32>
    %132 = arith.addf %131, %130 : vector<2x32xf32>
    %133 = arith.divf %131, %132 : vector<2x32xf32>
    %134 = vector.extract_strided_slice %127 {offsets = [0, 32], sizes = [2, 32], strides = [1, 1]} : vector<2x128xf32> to vector<2x32xf32>
    %135 = arith.negf %134 : vector<2x32xf32>
    %136 = math.exp %135 : vector<2x32xf32>
    %cst_32 = arith.constant 1.000000e+00 : f32
    %137 = vector.broadcast %cst_32 : f32 to vector<2x32xf32>
    %138 = arith.addf %137, %136 : vector<2x32xf32>
    %139 = arith.divf %137, %138 : vector<2x32xf32>
    %140 = vector.extract_strided_slice %127 {offsets = [0, 64], sizes = [2, 32], strides = [1, 1]} : vector<2x128xf32> to vector<2x32xf32>
    %141 = math.tanh %140 : vector<2x32xf32>
    %142 = vector.extract_strided_slice %127 {offsets = [0, 96], sizes = [2, 32], strides = [1, 1]} : vector<2x128xf32> to vector<2x32xf32>
    %143 = arith.negf %142 : vector<2x32xf32>
    %144 = math.exp %143 : vector<2x32xf32>
    %cst_33 = arith.constant 1.000000e+00 : f32
    %145 = vector.broadcast %cst_33 : f32 to vector<2x32xf32>
    %146 = arith.addf %145, %144 : vector<2x32xf32>
    %147 = arith.divf %145, %146 : vector<2x32xf32>
    %148 = arith.mulf %139, %121 : vector<2x32xf32>
    %149 = arith.mulf %133, %141 : vector<2x32xf32>
    %150 = arith.addf %148, %149 : vector<2x32xf32>
    %151 = math.tanh %150 : vector<2x32xf32>
    %152 = arith.mulf %147, %151 : vector<2x32xf32>
    %c8 = arith.constant 8 : index
    %c0_34 = arith.constant 0 : index
    %153 = vector.load %arg8[%c8, %c0_34] : memref<16x32xf32, #tpu.memory_space<vmem>>, vector<2x32xf32>
    tpu.vector_store %arg8[%c8, %c0_34], %152 {strides = array<i32>} : memref<16x32xf32, #tpu.memory_space<vmem>>, vector<2x32xf32>,
    %154 = vector.extract_strided_slice %5 {offsets = [10, 0], sizes = [2, 128], strides = [1, 1]} : vector<16x128xf32> to vector<2x128xf32>
    %cst_35 = arith.constant dense<0.000000e+00> : vector<2x128xf32>
    %155 = tpu.matmul %152, %6, %cst_35 {dimension_numbers = #tpu.dot_dimension_numbers<[1], [0], [0], [1], [0, 0, 1, 1], [], []>} : vector<2x32xf32>, vector<32x128xf32>, vector<2x128xf32> -> vector<2x128xf32>
    %156 = arith.addf %154, %155 : vector<2x128xf32>
    %157 = vector.extract_strided_slice %156 {offsets = [0, 0], sizes = [2, 32], strides = [1, 1]} : vector<2x128xf32> to vector<2x32xf32>
    %158 = arith.negf %157 : vector<2x32xf32>
    %159 = math.exp %158 : vector<2x32xf32>
    %cst_36 = arith.constant 1.000000e+00 : f32
    %160 = vector.broadcast %cst_36 : f32 to vector<2x32xf32>
    %161 = arith.addf %160, %159 : vector<2x32xf32>
    %162 = arith.divf %160, %161 : vector<2x32xf32>
    %163 = vector.extract_strided_slice %156 {offsets = [0, 32], sizes = [2, 32], strides = [1, 1]} : vector<2x128xf32> to vector<2x32xf32>
    %164 = arith.negf %163 : vector<2x32xf32>
    %165 = math.exp %164 : vector<2x32xf32>
    %cst_37 = arith.constant 1.000000e+00 : f32
    %166 = vector.broadcast %cst_37 : f32 to vector<2x32xf32>
    %167 = arith.addf %166, %165 : vector<2x32xf32>
    %168 = arith.divf %166, %167 : vector<2x32xf32>
    %169 = vector.extract_strided_slice %156 {offsets = [0, 64], sizes = [2, 32], strides = [1, 1]} : vector<2x128xf32> to vector<2x32xf32>
    %170 = math.tanh %169 : vector<2x32xf32>
    %171 = vector.extract_strided_slice %156 {offsets = [0, 96], sizes = [2, 32], strides = [1, 1]} : vector<2x128xf32> to vector<2x32xf32>
    %172 = arith.negf %171 : vector<2x32xf32>
    %173 = math.exp %172 : vector<2x32xf32>
    %cst_38 = arith.constant 1.000000e+00 : f32
    %174 = vector.broadcast %cst_38 : f32 to vector<2x32xf32>
    %175 = arith.addf %174, %173 : vector<2x32xf32>
    %176 = arith.divf %174, %175 : vector<2x32xf32>
    %177 = arith.mulf %168, %150 : vector<2x32xf32>
    %178 = arith.mulf %162, %170 : vector<2x32xf32>
    %179 = arith.addf %177, %178 : vector<2x32xf32>
    %180 = math.tanh %179 : vector<2x32xf32>
    %181 = arith.mulf %176, %180 : vector<2x32xf32>
    %c10 = arith.constant 10 : index
    %c0_39 = arith.constant 0 : index
    %182 = vector.load %arg8[%c10, %c0_39] : memref<16x32xf32, #tpu.memory_space<vmem>>, vector<2x32xf32>
    tpu.vector_store %arg8[%c10, %c0_39], %181 {strides = array<i32>} : memref<16x32xf32, #tpu.memory_space<vmem>>, vector<2x32xf32>,
    %183 = vector.extract_strided_slice %5 {offsets = [12, 0], sizes = [2, 128], strides = [1, 1]} : vector<16x128xf32> to vector<2x128xf32>
    %cst_40 = arith.constant dense<0.000000e+00> : vector<2x128xf32>
    %184 = tpu.matmul %181, %6, %cst_40 {dimension_numbers = #tpu.dot_dimension_numbers<[1], [0], [0], [1], [0, 0, 1, 1], [], []>} : vector<2x32xf32>, vector<32x128xf32>, vector<2x128xf32> -> vector<2x128xf32>
    %185 = arith.addf %183, %184 : vector<2x128xf32>
    %186 = vector.extract_strided_slice %185 {offsets = [0, 0], sizes = [2, 32], strides = [1, 1]} : vector<2x128xf32> to vector<2x32xf32>
    %187 = arith.negf %186 : vector<2x32xf32>
    %188 = math.exp %187 : vector<2x32xf32>
    %cst_41 = arith.constant 1.000000e+00 : f32
    %189 = vector.broadcast %cst_41 : f32 to vector<2x32xf32>
    %190 = arith.addf %189, %188 : vector<2x32xf32>
    %191 = arith.divf %189, %190 : vector<2x32xf32>
    %192 = vector.extract_strided_slice %185 {offsets = [0, 32], sizes = [2, 32], strides = [1, 1]} : vector<2x128xf32> to vector<2x32xf32>
    %193 = arith.negf %192 : vector<2x32xf32>
    %194 = math.exp %193 : vector<2x32xf32>
    %cst_42 = arith.constant 1.000000e+00 : f32
    %195 = vector.broadcast %cst_42 : f32 to vector<2x32xf32>
    %196 = arith.addf %195, %194 : vector<2x32xf32>
    %197 = arith.divf %195, %196 : vector<2x32xf32>
    %198 = vector.extract_strided_slice %185 {offsets = [0, 64], sizes = [2, 32], strides = [1, 1]} : vector<2x128xf32> to vector<2x32xf32>
    %199 = math.tanh %198 : vector<2x32xf32>
    %200 = vector.extract_strided_slice %185 {offsets = [0, 96], sizes = [2, 32], strides = [1, 1]} : vector<2x128xf32> to vector<2x32xf32>
    %201 = arith.negf %200 : vector<2x32xf32>
    %202 = math.exp %201 : vector<2x32xf32>
    %cst_43 = arith.constant 1.000000e+00 : f32
    %203 = vector.broadcast %cst_43 : f32 to vector<2x32xf32>
    %204 = arith.addf %203, %202 : vector<2x32xf32>
    %205 = arith.divf %203, %204 : vector<2x32xf32>
    %206 = arith.mulf %197, %179 : vector<2x32xf32>
    %207 = arith.mulf %191, %199 : vector<2x32xf32>
    %208 = arith.addf %206, %207 : vector<2x32xf32>
    %209 = math.tanh %208 : vector<2x32xf32>
    %210 = arith.mulf %205, %209 : vector<2x32xf32>
    %c12 = arith.constant 12 : index
    %c0_44 = arith.constant 0 : index
    %211 = vector.load %arg8[%c12, %c0_44] : memref<16x32xf32, #tpu.memory_space<vmem>>, vector<2x32xf32>
    tpu.vector_store %arg8[%c12, %c0_44], %210 {strides = array<i32>} : memref<16x32xf32, #tpu.memory_space<vmem>>, vector<2x32xf32>,
    %212 = vector.extract_strided_slice %5 {offsets = [14, 0], sizes = [2, 128], strides = [1, 1]} : vector<16x128xf32> to vector<2x128xf32>
    %cst_45 = arith.constant dense<0.000000e+00> : vector<2x128xf32>
    %213 = tpu.matmul %210, %6, %cst_45 {dimension_numbers = #tpu.dot_dimension_numbers<[1], [0], [0], [1], [0, 0, 1, 1], [], []>} : vector<2x32xf32>, vector<32x128xf32>, vector<2x128xf32> -> vector<2x128xf32>
    %214 = arith.addf %212, %213 : vector<2x128xf32>
    %215 = vector.extract_strided_slice %214 {offsets = [0, 0], sizes = [2, 32], strides = [1, 1]} : vector<2x128xf32> to vector<2x32xf32>
    %216 = arith.negf %215 : vector<2x32xf32>
    %217 = math.exp %216 : vector<2x32xf32>
    %cst_46 = arith.constant 1.000000e+00 : f32
    %218 = vector.broadcast %cst_46 : f32 to vector<2x32xf32>
    %219 = arith.addf %218, %217 : vector<2x32xf32>
    %220 = arith.divf %218, %219 : vector<2x32xf32>
    %221 = vector.extract_strided_slice %214 {offsets = [0, 32], sizes = [2, 32], strides = [1, 1]} : vector<2x128xf32> to vector<2x32xf32>
    %222 = arith.negf %221 : vector<2x32xf32>
    %223 = math.exp %222 : vector<2x32xf32>
    %cst_47 = arith.constant 1.000000e+00 : f32
    %224 = vector.broadcast %cst_47 : f32 to vector<2x32xf32>
    %225 = arith.addf %224, %223 : vector<2x32xf32>
    %226 = arith.divf %224, %225 : vector<2x32xf32>
    %227 = vector.extract_strided_slice %214 {offsets = [0, 64], sizes = [2, 32], strides = [1, 1]} : vector<2x128xf32> to vector<2x32xf32>
    %228 = math.tanh %227 : vector<2x32xf32>
    %229 = vector.extract_strided_slice %214 {offsets = [0, 96], sizes = [2, 32], strides = [1, 1]} : vector<2x128xf32> to vector<2x32xf32>
    %230 = arith.negf %229 : vector<2x32xf32>
    %231 = math.exp %230 : vector<2x32xf32>
    %cst_48 = arith.constant 1.000000e+00 : f32
    %232 = vector.broadcast %cst_48 : f32 to vector<2x32xf32>
    %233 = arith.addf %232, %231 : vector<2x32xf32>
    %234 = arith.divf %232, %233 : vector<2x32xf32>
    %235 = arith.mulf %226, %208 : vector<2x32xf32>
    %236 = arith.mulf %220, %228 : vector<2x32xf32>
    %237 = arith.addf %235, %236 : vector<2x32xf32>
    %238 = math.tanh %237 : vector<2x32xf32>
    %239 = arith.mulf %234, %238 : vector<2x32xf32>
    %c14 = arith.constant 14 : index
    %c0_49 = arith.constant 0 : index
    %240 = vector.load %arg8[%c14, %c0_49] : memref<16x32xf32, #tpu.memory_space<vmem>>, vector<2x32xf32>
    tpu.vector_store %arg8[%c14, %c0_49], %239 {strides = array<i32>} : memref<16x32xf32, #tpu.memory_space<vmem>>, vector<2x32xf32>,
    %c0_50 = arith.constant 0 : index
    %c0_51 = arith.constant 0 : index
    %241 = vector.load %arg8[%c0_50, %c0_51] : memref<16x32xf32, #tpu.memory_space<vmem>>, vector<16x32xf32>
    %c0_52 = arith.constant 0 : index
    %c0_53 = arith.constant 0 : index
    %242 = vector.load %arg5[%c0_52, %c0_53] : memref<32x2xf32, #tpu.memory_space<vmem>>, vector<32x2xf32>
    %cst_54 = arith.constant dense<0.000000e+00> : vector<16x2xf32>
    %243 = tpu.matmul %241, %242, %cst_54 {dimension_numbers = #tpu.dot_dimension_numbers<[1], [0], [0], [1], [0, 0, 1, 1], [], []>} : vector<16x32xf32>, vector<32x2xf32>, vector<16x2xf32> -> vector<16x2xf32>
    %c0_55 = arith.constant 0 : index
    %c0_56 = arith.constant 0 : index
    %244 = vector.load %arg6[%c0_55, %c0_56] : memref<1x2xf32, #tpu.memory_space<vmem>>, vector<1x2xf32>
    %245 = vector.broadcast %244 : vector<1x2xf32> to vector<16x2xf32>
    %246 = arith.addf %243, %245 : vector<16x2xf32>
    %247 = tpu.iota {dimensions = array<i32: 1>} : vector<16x2xi32>
    %c1_i32 = arith.constant 1 : i32
    %248 = vector.broadcast %c1_i32 : i32 to vector<16x2xi32>
    %249 = arith.cmpi eq, %247, %248 : vector<16x2xi32>
    %cst_57 = arith.constant -2.99573231 : f32
    %cst_58 = arith.constant 11.5129251 : f32
    %250 = vector.broadcast %cst_57 : f32 to vector<16x2xf32>
    %251 = arith.maximumf %250, %246 : vector<16x2xf32>
    %252 = vector.broadcast %cst_58 : f32 to vector<16x2xf32>
    %253 = arith.minimumf %252, %251 : vector<16x2xf32>
    %254 = arith.select %249, %253, %246 : vector<16x2xi1>, vector<16x2xf32>
    %c0_59 = arith.constant 0 : index
    %c0_60 = arith.constant 0 : index
    %255 = vector.load %arg7[%c0_59, %c0_60] : memref<16x2xf32, #tpu.memory_space<vmem>>, vector<16x2xf32>
    tpu.vector_store %arg7[%c0_59, %c0_60], %254 {strides = array<i32>} : memref<16x2xf32, #tpu.memory_space<vmem>>, vector<16x2xf32>,
    return
  }
  func.func @transform_0(%arg0: i32) -> (i32, i32) {
    %c0_i32 = arith.constant 0 : i32
    %c0_i32_0 = arith.constant 0 : i32
    %c0_i32_1 = arith.constant 0 : i32
    return %c0_i32, %c0_i32_0 : i32, i32
  }
  func.func @transform_1(%arg0: i32) -> (i32, i32) {
    %c0_i32 = arith.constant 0 : i32
    %c0_i32_0 = arith.constant 0 : i32
    %c0_i32_1 = arith.constant 0 : i32
    return %c0_i32, %c0_i32_0 : i32, i32
  }
  func.func @transform_2(%arg0: i32) -> (i32, i32) {
    %c0_i32 = arith.constant 0 : i32
    %c0_i32_0 = arith.constant 0 : i32
    %c0_i32_1 = arith.constant 0 : i32
    return %c0_i32, %c0_i32_0 : i32, i32
  }
  func.func @transform_3(%arg0: i32) -> (i32, i32) {
    %c0_i32 = arith.constant 0 : i32
    %c0_i32_0 = arith.constant 0 : i32
    %c0_i32_1 = arith.constant 0 : i32
    return %c0_i32, %c0_i32_0 : i32, i32
  }
  func.func @transform_4(%arg0: i32) -> (i32, i32) {
    %c0_i32 = arith.constant 0 : i32
    %c0_i32_0 = arith.constant 0 : i32
    %c0_i32_1 = arith.constant 0 : i32
    return %c0_i32, %c0_i32_0 : i32, i32
  }
  func.func @transform_5(%arg0: i32) -> (i32, i32) {
    %c0_i32 = arith.constant 0 : i32
    %c0_i32_0 = arith.constant 0 : i32
    %c0_i32_1 = arith.constant 0 : i32
    return %c0_i32, %c0_i32_0 : i32, i32
  }
  func.func @transform_6(%arg0: i32) -> (i32, i32) {
    %c0_i32 = arith.constant 0 : i32
    %c0_i32_0 = arith.constant 0 : i32
    %c0_i32_1 = arith.constant 0 : i32
    return %c0_i32, %c0_i32_0 : i32, i32
  }
}

</mosaic_0001>

<llo_original>
// kernel: tpu_custom_call.1
$region0: #{tpu_custom_call.1}
  #allocation0 [shape = 'u32[]', space=smem, size = 0x4, offset = 0x4, fixed_abs, tag = 'smem constant byte address 0x4 - core index']
  #allocation1 [shape = 'u32[144,128]{1,0:T(1,128)}', space=vmem, size = 0x12000, scoped, tag = 'internal scratch']
  #allocation2 [shape = 'f32[16,32]{1,0:T(8,128)}', space=vmem, size = 0x2000, scoped, tag = 'scratch operand']
  %s0 = inlined_call_operand.vmem [shape: f32[16,8], index: 0, kind: input, shape index: {}]
  %s1 = inlined_call_operand.vmem [shape: f32[8,128], index: 1, kind: input, shape index: {}]
  %s2 = inlined_call_operand.vmem [shape: f32[32,128], index: 2, kind: input, shape index: {}]
  %s3 = inlined_call_operand.vmem [shape: f32[1,128], index: 3, kind: input, shape index: {}]
  %s4 = inlined_call_operand.vmem [shape: f32[32,2], index: 4, kind: input, shape index: {}]
  %s5 = inlined_call_operand.vmem [shape: f32[1,2], index: 5, kind: input, shape index: {}]
  %s6 = inlined_call_operand.vmem [shape: f32[16,2], index: 6, kind: output, shape index: {}]
  %s7 = sld [smem:[#allocation0]]
  $region34: #{tpu_custom_call.1} parent=0
    _
  %s9 = ssub.s32 1, %s7
  %s10 = scalar_select 0, %s9, %s7
  // Predicated region
  $region2: #{tpu_custom_call.1} parent=0 // pred_check
    _
  $region3: #{tpu_custom_call.1} parent=0 // pred_check_branch
    %12 = sbr.rel (0) target = $region5
  $region4: #{tpu_custom_call.1} parent=0 // pred_region
    _
  $region5: #{tpu_custom_call.1} parent=0 // pred_fallthru
    _
  // Predicated region
  $region6: #{tpu_custom_call.1} parent=0 // pred_check
    _
  $region7: #{tpu_custom_call.1} parent=0 // pred_check_branch
    %14 = sbr.rel (0) target = $region9
  $region8: #{tpu_custom_call.1} parent=0 // pred_region
    _
  $region9: #{tpu_custom_call.1} parent=0 // pred_fallthru
    _
  // Predicated region
  $region10: #{tpu_custom_call.1} parent=0 // pred_check
    _
  $region11: #{tpu_custom_call.1} parent=0 // pred_check_branch
    %16 = sbr.rel (0) target = $region13
  $region12: #{tpu_custom_call.1} parent=0 // pred_region
    _
  $region13: #{tpu_custom_call.1} parent=0 // pred_fallthru
    _
  // Predicated region
  $region14: #{tpu_custom_call.1} parent=0 // pred_check
    _
  $region15: #{tpu_custom_call.1} parent=0 // pred_check_branch
    %18 = sbr.rel (0) target = $region17
  $region16: #{tpu_custom_call.1} parent=0 // pred_region
    _
  $region17: #{tpu_custom_call.1} parent=0 // pred_fallthru
    _
  // Predicated region
  $region18: #{tpu_custom_call.1} parent=0 // pred_check
    _
  $region19: #{tpu_custom_call.1} parent=0 // pred_check_branch
    %20 = sbr.rel (0) target = $region21
  $region20: #{tpu_custom_call.1} parent=0 // pred_region
    _
  $region21: #{tpu_custom_call.1} parent=0 // pred_fallthru
    _
  // Predicated region
  $region22: #{tpu_custom_call.1} parent=0 // pred_check
    _
  $region23: #{tpu_custom_call.1} parent=0 // pred_check_branch
    %22 = sbr.rel (0) target = $region25
  $region24: #{tpu_custom_call.1} parent=0 // pred_region
    _
  $region25: #{tpu_custom_call.1} parent=0 // pred_fallthru
    _
  %v23 = vld [vmem:[%s0] sm:$0xff]
  %v24 = vld [vmem:[%s0 + $0x8] sm:$0xff]
  %v25 = vld [vmem:[%s1] sm:$0xff]
  %v26 = vld [vmem:[%s3] sm:$0x1]
  %v28 = vlaneseq
  %v29 = vshrl.u32 %v28, 7
  %v30 = vsub.s32 0, %v29
  %v31 = vrot.slane %v26, %v30
  %vm33 = vcmask 64512
  %v35 = vsel %vm33, %v23, 0
  %v38 = vsel %vm33, %v24, 0
  %40 = vmatprep.subr.mxu0 0.0
  %41 = vmatpush1.msra.mxu0 %v25
  %42 = vmatprep.subr.mxu0 0.0
  %43 = vmatpush1.msra.mxu0 0.0
  %44 = vmatprep.subr.mxu0 0.0
  %45 = vmatpush1.msra.mxu0 0.0
  %46 = vmatprep.subr.mxu0 0.0
  %47 = vmatpush1.msra.mxu0 0.0
  %48 = vmatprep.subr.mxu0 0.0
  %49 = vmatpush1.msra.mxu0 0.0
  %50 = vmatprep.subr.mxu0 0.0
  %51 = vmatpush1.msra.mxu0 0.0
  %52 = vmatprep.subr.mxu0 0.0
  %53 = vmatpush1.msra.mxu0 0.0
  %54 = vmatprep.subr.mxu0 0.0
  %55 = vmatpush1.msra.mxu0 0.0
  %56 = vmatprep.subr.mxu0 0.0
  %57 = vmatpush1.msra.mxu0 0.0
  %58 = vmatprep.subr.mxu0 0.0
  %59 = vmatpush1.msra.mxu0 0.0
  %60 = vmatprep.subr.mxu0 0.0
  %61 = vmatpush1.msra.mxu0 0.0
  %62 = vmatprep.subr.mxu0 0.0
  %63 = vmatpush1.msra.mxu0 0.0
  %64 = vmatprep.subr.mxu0 0.0
  %65 = vmatpush1.msra.mxu0 0.0
  %66 = vmatprep.subr.mxu0 0.0
  %67 = vmatpush1.msra.mxu0 0.0
  %68 = vmatprep.subr.mxu0 0.0
  %69 = vmatpush1.msra.mxu0 0.0
  %70 = vmatprep.subr.mxu0 0.0
  %71 = vmatpush1.msra.mxu0 0.0
  %72 = vmatprep.subr.mxu0 0.0
  %73 = vmatpush1.msra.mxu0 0.0
  %74 = vmatprep.subr.mxu0 0.0
  %75 = vmatpush1.msra.mxu0 0.0
  %76 = vmatprep.subr.mxu0 0.0
  %77 = vmatpush1.msra.mxu0 0.0
  %78 = vmatprep.subr.mxu0 0.0
  %79 = vmatpush1.msra.mxu0 0.0
  %80 = vmatprep.subr.mxu0 0.0
  %81 = vmatpush1.msra.mxu0 0.0
  %82 = vmatprep.subr.mxu0 0.0
  %83 = vmatpush1.msra.mxu0 0.0
  %84 = vmatprep.subr.mxu0 0.0
  %85 = vmatpush1.msra.mxu0 0.0
  %86 = vmatprep.subr.mxu0 0.0
  %87 = vmatpush1.msra.mxu0 0.0
  %88 = vmatprep.subr.mxu0 0.0
  %89 = vmatpush1.msra.mxu0 0.0
  %90 = vmatprep.subr.mxu0 0.0
  %91 = vmatpush1.msra.mxu0 0.0
  %92 = vmatprep.subr.mxu0 0.0
  %93 = vmatpush1.msra.mxu0 0.0
  %94 = vmatprep.subr.mxu0 0.0
  %95 = vmatpush1.msra.mxu0 0.0
  %96 = vmatprep.subr.mxu0 0.0
  %97 = vmatpush1.msra.mxu0 0.0
  %98 = vmatprep.subr.mxu0 0.0
  %99 = vmatpush1.msra.mxu0 0.0
  %100 = vmatprep.subr.mxu0 0.0
  %101 = vmatpush1.msra.mxu0 0.0
  %102 = vmatprep.subr.mxu0 0.0
  %103 = vmatpush1.msra.mxu0 0.0
  %104 = vmatprep.mubr.f32.mxu0 0.0
  %105 = vmatmul.mubr.f32.gmra.mrb[0].mxu0 %v35
  %v106 = vpop.f32.mrb[0].mxu0
  %v107 = vadd.f32 %v31, %v106
  %v108 = vpop.f32.mrb[0].mxu0
  %109 = vmatprep.mubr.f32.mxu0 0.0
  %110 = vmatmul.mubr.f32.gmra.mrb[0].mxu0 %v38
  %v111 = vpop.f32.mrb[0].mxu0
  %v112 = vadd.f32 %v31, %v111
  %v113 = vpop.f32.mrb[0].mxu0
  %114 = vdwg.mxu0
  %v115 = vld [vmem:[%s2] sm:$0xff]
  %v116 = vld [vmem:[%s2 + $0x8] sm:$0xff]
  %v117 = vld [vmem:[%s2 + $0x10] sm:$0xff]
  %v118 = vld [vmem:[%s2 + $0x18] sm:$0xff]
  %vm119 = vcmask 261120
  %v121 = vsel %vm119, 0.0, 0
  %123 = vmatprep.subr.mxu0 0.0
  %124 = vmatpush1.msra.mxu0 %v115
  %125 = vmatprep.subr.mxu0 0.0
  %126 = vmatpush1.msra.mxu0 %v116
  %127 = vmatprep.subr.mxu0 0.0
  %128 = vmatpush1.msra.mxu0 %v117
  %129 = vmatprep.subr.mxu0 0.0
  %130 = vmatpush1.msra.mxu0 %v118
  %131 = vmatprep.subr.mxu0 0.0
  %132 = vmatpush1.msra.mxu0 0.0
  %133 = vmatprep.subr.mxu0 0.0
  %134 = vmatpush1.msra.mxu0 0.0
  %135 = vmatprep.subr.mxu0 0.0
  %136 = vmatpush1.msra.mxu0 0.0
  %137 = vmatprep.subr.mxu0 0.0
  %138 = vmatpush1.msra.mxu0 0.0
  %139 = vmatprep.subr.mxu0 0.0
  %140 = vmatpush1.msra.mxu0 0.0
  %141 = vmatprep.subr.mxu0 0.0
  %142 = vmatpush1.msra.mxu0 0.0
  %143 = vmatprep.subr.mxu0 0.0
  %144 = vmatpush1.msra.mxu0 0.0
  %145 = vmatprep.subr.mxu0 0.0
  %146 = vmatpush1.msra.mxu0 0.0
  %147 = vmatprep.subr.mxu0 0.0
  %148 = vmatpush1.msra.mxu0 0.0
  %149 = vmatprep.subr.mxu0 0.0
  %150 = vmatpush1.msra.mxu0 0.0
  %151 = vmatprep.subr.mxu0 0.0
  %152 = vmatpush1.msra.mxu0 0.0
  %153 = vmatprep.subr.mxu0 0.0
  %154 = vmatpush1.msra.mxu0 0.0
  %155 = vmatprep.subr.mxu0 0.0
  %156 = vmatpush1.msra.mxu0 0.0
  %157 = vmatprep.subr.mxu0 0.0
  %158 = vmatpush1.msra.mxu0 0.0
  %159 = vmatprep.subr.mxu0 0.0
  %160 = vmatpush1.msra.mxu0 0.0
  %161 = vmatprep.subr.mxu0 0.0
  %162 = vmatpush1.msra.mxu0 0.0
  %163 = vmatprep.subr.mxu0 0.0
  %164 = vmatpush1.msra.mxu0 0.0
  %165 = vmatprep.subr.mxu0 0.0
  %166 = vmatpush1.msra.mxu0 0.0
  %167 = vmatprep.subr.mxu0 0.0
  %168 = vmatpush1.msra.mxu0 0.0
  %169 = vmatprep.subr.mxu0 0.0
  %170 = vmatpush1.msra.mxu0 0.0
  %171 = vmatprep.subr.mxu0 0.0
  %172 = vmatpush1.msra.mxu0 0.0
  %173 = vmatprep.subr.mxu0 0.0
  %174 = vmatpush1.msra.mxu0 0.0
  %175 = vmatprep.subr.mxu0 0.0
  %176 = vmatpush1.msra.mxu0 0.0
  %177 = vmatprep.subr.mxu0 0.0
  %178 = vmatpush1.msra.mxu0 0.0
  %179 = vmatprep.subr.mxu0 0.0
  %180 = vmatpush1.msra.mxu0 0.0
  %181 = vmatprep.subr.mxu0 0.0
  %182 = vmatpush1.msra.mxu0 0.0
  %183 = vmatprep.subr.mxu0 0.0
  %184 = vmatpush1.msra.mxu0 0.0
  %185 = vmatprep.subr.mxu0 0.0
  %186 = vmatpush1.msra.mxu0 0.0
  %187 = vmatprep.mubr.f32.mxu0 0.0
  %188 = vmatmul.mubr.f32.gmra.mrb[0].mxu0 %v121
  %v189 = vpop.f32.mrb[0].mxu0
  %v190 = vadd.f32 0.0, %v189
  %v191 = vpop.f32.mrb[0].mxu0
  %192 = vdwg.mxu0
  %v193 = vadd.f32 %v107, %v190
  %v194 = vxor.u32 %v193, 2147483648
  %v195 = vmul.f32 %v194, 1.442695
  %v196 = vpow.pop %v195
  %v197 = vadd.f32 %v196, 1.0
  %v198 = vrcp.pop %v197
  %v199 = vmul.f32 1.0, %v198
  %v200 = vtanh.pop %v193
  %v201 = vmul.f32 %v199, 0.0
  %203 = vrot.lane.b32.xlu0 %v200, 64
  %v204 = vpop.permute.xlu0 %203
  %v206 = vmul.f32 %v199, %v204
  %208 = vrot.lane.b32.xlu0 %v206, 32
  %v209 = vpop.permute.xlu0 %208
  %v211 = vadd.f32 %v201, %v209
  %v212 = vtanh.pop %v211
  %214 = vrot.lane.b32.xlu0 %v212, 64
  %v215 = vpop.permute.xlu0 %214
  %v217 = vmul.f32 %v199, %v215
  %219 = vrot.lane.b32.xlu0 %v217, 32
  %v220 = vpop.permute.xlu0 %219
  %vm222 = vcmask 254976
  %223 = vst.msk [vmem:[#allocation2] sm:$0x3] %vm222, %v220
  %v224 = vsel %vm119, %v220, 0
  %226 = vmatprep.subr.mxu0 0.0
  %227 = vmatpush1.msra.mxu0 %v115
  %228 = vmatprep.subr.mxu0 0.0
  %229 = vmatpush1.msra.mxu0 %v116
  %230 = vmatprep.subr.mxu0 0.0
  %231 = vmatpush1.msra.mxu0 %v117
  %232 = vmatprep.subr.mxu0 0.0
  %233 = vmatpush1.msra.mxu0 %v118
  %234 = vmatprep.subr.mxu0 0.0
  %235 = vmatpush1.msra.mxu0 0.0
  %236 = vmatprep.subr.mxu0 0.0
  %237 = vmatpush1.msra.mxu0 0.0
  %238 = vmatprep.subr.mxu0 0.0
  %239 = vmatpush1.msra.mxu0 0.0
  %240 = vmatprep.subr.mxu0 0.0
  %241 = vmatpush1.msra.mxu0 0.0
  %242 = vmatprep.subr.mxu0 0.0
  %243 = vmatpush1.msra.mxu0 0.0
  %244 = vmatprep.subr.mxu0 0.0
  %245 = vmatpush1.msra.mxu0 0.0
  %246 = vmatprep.subr.mxu0 0.0
  %247 = vmatpush1.msra.mxu0 0.0
  %248 = vmatprep.subr.mxu0 0.0
  %249 = vmatpush1.msra.mxu0 0.0
  %250 = vmatprep.subr.mxu0 0.0
  %251 = vmatpush1.msra.mxu0 0.0
  %252 = vmatprep.subr.mxu0 0.0
  %253 = vmatpush1.msra.mxu0 0.0
  %254 = vmatprep.subr.mxu0 0.0
  %255 = vmatpush1.msra.mxu0 0.0
  %256 = vmatprep.subr.mxu0 0.0
  %257 = vmatpush1.msra.mxu0 0.0
  %258 = vmatprep.subr.mxu0 0.0
  %259 = vmatpush1.msra.mxu0 0.0
  %260 = vmatprep.subr.mxu0 0.0
  %261 = vmatpush1.msra.mxu0 0.0
  %262 = vmatprep.subr.mxu0 0.0
  %263 = vmatpush1.msra.mxu0 0.0
  %264 = vmatprep.subr.mxu0 0.0
  %265 = vmatpush1.msra.mxu0 0.0
  %266 = vmatprep.subr.mxu0 0.0
  %267 = vmatpush1.msra.mxu0 0.0
  %268 = vmatprep.subr.mxu0 0.0
  %269 = vmatpush1.msra.mxu0 0.0
  %270 = vmatprep.subr.mxu0 0.0
  %271 = vmatpush1.msra.mxu0 0.0
  %272 = vmatprep.subr.mxu0 0.0
  %273 = vmatpush1.msra.mxu0 0.0
  %274 = vmatprep.subr.mxu0 0.0
  %275 = vmatpush1.msra.mxu0 0.0
  %276 = vmatprep.subr.mxu0 0.0
  %277 = vmatpush1.msra.mxu0 0.0
  %278 = vmatprep.subr.mxu0 0.0
  %279 = vmatpush1.msra.mxu0 0.0
  %280 = vmatprep.subr.mxu0 0.0
  %281 = vmatpush1.msra.mxu0 0.0
  %282 = vmatprep.subr.mxu0 0.0
  %283 = vmatpush1.msra.mxu0 0.0
  %284 = vmatprep.subr.mxu0 0.0
  %285 = vmatpush1.msra.mxu0 0.0
  %286 = vmatprep.subr.mxu0 0.0
  %287 = vmatpush1.msra.mxu0 0.0
  %288 = vmatprep.subr.mxu0 0.0
  %289 = vmatpush1.msra.mxu0 0.0
  %290 = vmatprep.mubr.f32.mxu0 0.0
  %291 = vmatmul.mubr.f32.gmra.mrb[0].mxu0 %v224
  %v292 = vpop.f32.mrb[0].mxu0
  %v293 = vadd.f32 0.0, %v292
  %v294 = vpop.f32.mrb[0].mxu0
  %295 = vdwg.mxu0
  %v297 = vrot.slane %v293, 6
  %v299 = vadd.f32 %v107, %v297
  %v300 = vxor.u32 %v299, 2147483648
  %v301 = vmul.f32 %v300, 1.442695
  %v302 = vpow.pop %v301
  %v303 = vadd.f32 %v302, 1.0
  %v304 = vrcp.pop %v303
  %v305 = vmul.f32 1.0, %v304
  %v306 = vtanh.pop %v299
  %v308 = vrot.slane %v211, 6
  %v310 = vmul.f32 %v305, %v308
  %312 = vrot.lane.b32.xlu0 %v306, 64
  %v313 = vpop.permute.xlu0 %312
  %v315 = vmul.f32 %v305, %v313
  %317 = vrot.lane.b32.xlu0 %v315, 32
  %v318 = vpop.permute.xlu0 %317
  %v320 = vadd.f32 %v310, %v318
  %v321 = vtanh.pop %v320
  %323 = vrot.lane.b32.xlu0 %v321, 64
  %v324 = vpop.permute.xlu0 %323
  %v326 = vmul.f32 %v305, %v324
  %328 = vrot.lane.b32.xlu0 %v326, 32
  %v329 = vpop.permute.xlu0 %328
  %vm331 = vcmask 257026
  %332 = vst.msk [vmem:[#allocation2] sm:$0xc] %vm331, %v329
  %v333 = vrot.slane %v326, 2
  %334 = vrot.lane.b32.xlu0 %v333, 32
  %v335 = vpop.permute.xlu0 %334
  %v336 = vsel %vm119, %v335, 0
  %338 = vmatprep.subr.mxu0 0.0
  %339 = vmatpush1.msra.mxu0 %v115
  %340 = vmatprep.subr.mxu0 0.0
  %341 = vmatpush1.msra.mxu0 %v116
  %342 = vmatprep.subr.mxu0 0.0
  %343 = vmatpush1.msra.mxu0 %v117
  %344 = vmatprep.subr.mxu0 0.0
  %345 = vmatpush1.msra.mxu0 %v118
  %346 = vmatprep.subr.mxu0 0.0
  %347 = vmatpush1.msra.mxu0 0.0
  %348 = vmatprep.subr.mxu0 0.0
  %349 = vmatpush1.msra.mxu0 0.0
  %350 = vmatprep.subr.mxu0 0.0
  %351 = vmatpush1.msra.mxu0 0.0
  %352 = vmatprep.subr.mxu0 0.0
  %353 = vmatpush1.msra.mxu0 0.0
  %354 = vmatprep.subr.mxu0 0.0
  %355 = vmatpush1.msra.mxu0 0.0
  %356 = vmatprep.subr.mxu0 0.0
  %357 = vmatpush1.msra.mxu0 0.0
  %358 = vmatprep.subr.mxu0 0.0
  %359 = vmatpush1.msra.mxu0 0.0
  %360 = vmatprep.subr.mxu0 0.0
  %361 = vmatpush1.msra.mxu0 0.0
  %362 = vmatprep.subr.mxu0 0.0
  %363 = vmatpush1.msra.mxu0 0.0
  %364 = vmatprep.subr.mxu0 0.0
  %365 = vmatpush1.msra.mxu0 0.0
  %366 = vmatprep.subr.mxu0 0.0
  %367 = vmatpush1.msra.mxu0 0.0
  %368 = vmatprep.subr.mxu0 0.0
  %369 = vmatpush1.msra.mxu0 0.0
  %370 = vmatprep.subr.mxu0 0.0
  %371 = vmatpush1.msra.mxu0 0.0
  %372 = vmatprep.subr.mxu0 0.0
  %373 = vmatpush1.msra.mxu0 0.0
  %374 = vmatprep.subr.mxu0 0.0
  %375 = vmatpush1.msra.mxu0 0.0
  %376 = vmatprep.subr.mxu0 0.0
  %377 = vmatpush1.msra.mxu0 0.0
  %378 = vmatprep.subr.mxu0 0.0
  %379 = vmatpush1.msra.mxu0 0.0
  %380 = vmatprep.subr.mxu0 0.0
  %381 = vmatpush1.msra.mxu0 0.0
  %382 = vmatprep.subr.mxu0 0.0
  %383 = vmatpush1.msra.mxu0 0.0
  %384 = vmatprep.subr.mxu0 0.0
  %385 = vmatpush1.msra.mxu0 0.0
  %386 = vmatprep.subr.mxu0 0.0
  %387 = vmatpush1.msra.mxu0 0.0
  %388 = vmatprep.subr.mxu0 0.0
  %389 = vmatpush1.msra.mxu0 0.0
  %390 = vmatprep.subr.mxu0 0.0
  %391 = vmatpush1.msra.mxu0 0.0
  %392 = vmatprep.subr.mxu0 0.0
  %393 = vmatpush1.msra.mxu0 0.0
  %394 = vmatprep.subr.mxu0 0.0
  %395 = vmatpush1.msra.mxu0 0.0
  %396 = vmatprep.subr.mxu0 0.0
  %397 = vmatpush1.msra.mxu0 0.0
  %398 = vmatprep.subr.mxu0 0.0
  %399 = vmatpush1.msra.mxu0 0.0
  %400 = vmatprep.subr.mxu0 0.0
  %401 = vmatpush1.msra.mxu0 0.0
  %402 = vmatprep.mubr.f32.mxu0 0.0
  %403 = vmatmul.mubr.f32.gmra.mrb[0].mxu0 %v336
  %v404 = vpop.f32.mrb[0].mxu0
  %v405 = vadd.f32 0.0, %v404
  %v406 = vpop.f32.mrb[0].mxu0
  %407 = vdwg.mxu0
  %v409 = vrot.slane %v405, 4
  %v411 = vadd.f32 %v107, %v409
  %v412 = vxor.u32 %v411, 2147483648
  %v413 = vmul.f32 %v412, 1.442695
  %v414 = vpow.pop %v413
  %v415 = vadd.f32 %v414, 1.0
  %v416 = vrcp.pop %v415
  %v417 = vmul.f32 1.0, %v416
  %v418 = vtanh.pop %v411
  %v420 = vrot.slane %v320, 6
  %v422 = vmul.f32 %v417, %v420
  %424 = vrot.lane.b32.xlu0 %v418, 64
  %v425 = vpop.permute.xlu0 %424
  %v427 = vmul.f32 %v417, %v425
  %429 = vrot.lane.b32.xlu0 %v427, 32
  %v430 = vpop.permute.xlu0 %429
  %v432 = vadd.f32 %v422, %v430
  %v433 = vtanh.pop %v432
  %435 = vrot.lane.b32.xlu0 %v433, 64
  %v436 = vpop.permute.xlu0 %435
  %v438 = vmul.f32 %v417, %v436
  %440 = vrot.lane.b32.xlu0 %v438, 32
  %v441 = vpop.permute.xlu0 %440
  %vm443 = vcmask 259076
  %444 = vst.msk [vmem:[#allocation2] sm:$0x30] %vm443, %v441
  %v445 = vrot.slane %v438, 4
  %446 = vrot.lane.b32.xlu0 %v445, 32
  %v447 = vpop.permute.xlu0 %446
  %v448 = vsel %vm119, %v447, 0
  %450 = vmatprep.subr.mxu0 0.0
  %451 = vmatpush1.msra.mxu0 %v115
  %452 = vmatprep.subr.mxu0 0.0
  %453 = vmatpush1.msra.mxu0 %v116
  %454 = vmatprep.subr.mxu0 0.0
  %455 = vmatpush1.msra.mxu0 %v117
  %456 = vmatprep.subr.mxu0 0.0
  %457 = vmatpush1.msra.mxu0 %v118
  %458 = vmatprep.subr.mxu0 0.0
  %459 = vmatpush1.msra.mxu0 0.0
  %460 = vmatprep.subr.mxu0 0.0
  %461 = vmatpush1.msra.mxu0 0.0
  %462 = vmatprep.subr.mxu0 0.0
  %463 = vmatpush1.msra.mxu0 0.0
  %464 = vmatprep.subr.mxu0 0.0
  %465 = vmatpush1.msra.mxu0 0.0
  %466 = vmatprep.subr.mxu0 0.0
  %467 = vmatpush1.msra.mxu0 0.0
  %468 = vmatprep.subr.mxu0 0.0
  %469 = vmatpush1.msra.mxu0 0.0
  %470 = vmatprep.subr.mxu0 0.0
  %471 = vmatpush1.msra.mxu0 0.0
  %472 = vmatprep.subr.mxu0 0.0
  %473 = vmatpush1.msra.mxu0 0.0
  %474 = vmatprep.subr.mxu0 0.0
  %475 = vmatpush1.msra.mxu0 0.0
  %476 = vmatprep.subr.mxu0 0.0
  %477 = vmatpush1.msra.mxu0 0.0
  %478 = vmatprep.subr.mxu0 0.0
  %479 = vmatpush1.msra.mxu0 0.0
  %480 = vmatprep.subr.mxu0 0.0
  %481 = vmatpush1.msra.mxu0 0.0
  %482 = vmatprep.subr.mxu0 0.0
  %483 = vmatpush1.msra.mxu0 0.0
  %484 = vmatprep.subr.mxu0 0.0
  %485 = vmatpush1.msra.mxu0 0.0
  %486 = vmatprep.subr.mxu0 0.0
  %487 = vmatpush1.msra.mxu0 0.0
  %488 = vmatprep.subr.mxu0 0.0
  %489 = vmatpush1.msra.mxu0 0.0
  %490 = vmatprep.subr.mxu0 0.0
  %491 = vmatpush1.msra.mxu0 0.0
  %492 = vmatprep.subr.mxu0 0.0
  %493 = vmatpush1.msra.mxu0 0.0
  %494 = vmatprep.subr.mxu0 0.0
  %495 = vmatpush1.msra.mxu0 0.0
  %496 = vmatprep.subr.mxu0 0.0
  %497 = vmatpush1.msra.mxu0 0.0
  %498 = vmatprep.subr.mxu0 0.0
  %499 = vmatpush1.msra.mxu0 0.0
  %500 = vmatprep.subr.mxu0 0.0
  %501 = vmatpush1.msra.mxu0 0.0
  %502 = vmatprep.subr.mxu0 0.0
  %503 = vmatpush1.msra.mxu0 0.0
  %504 = vmatprep.subr.mxu0 0.0
  %505 = vmatpush1.msra.mxu0 0.0
  %506 = vmatprep.subr.mxu0 0.0
  %507 = vmatpush1.msra.mxu0 0.0
  %508 = vmatprep.subr.mxu0 0.0
  %509 = vmatpush1.msra.mxu0 0.0
  %510 = vmatprep.subr.mxu0 0.0
  %511 = vmatpush1.msra.mxu0 0.0
  %512 = vmatprep.subr.mxu0 0.0
  %513 = vmatpush1.msra.mxu0 0.0
  %514 = vmatprep.mubr.f32.mxu0 0.0
  %515 = vmatmul.mubr.f32.gmra.mrb[0].mxu0 %v448
  %v516 = vpop.f32.mrb[0].mxu0
  %v517 = vadd.f32 0.0, %v516
  %v518 = vpop.f32.mrb[0].mxu0
  %519 = vdwg.mxu0
  %v521 = vrot.slane %v517, 2
  %v523 = vadd.f32 %v107, %v521
  %v524 = vxor.u32 %v523, 2147483648
  %v525 = vmul.f32 %v524, 1.442695
  %v526 = vpow.pop %v525
  %v527 = vadd.f32 %v526, 1.0
  %v528 = vrcp.pop %v527
  %v529 = vmul.f32 1.0, %v528
  %v530 = vtanh.pop %v523
  %v532 = vrot.slane %v432, 6
  %v534 = vmul.f32 %v529, %v532
  %536 = vrot.lane.b32.xlu0 %v530, 64
  %v537 = vpop.permute.xlu0 %536
  %v539 = vmul.f32 %v529, %v537
  %541 = vrot.lane.b32.xlu0 %v539, 32
  %v542 = vpop.permute.xlu0 %541
  %v544 = vadd.f32 %v534, %v542
  %v545 = vtanh.pop %v544
  %547 = vrot.lane.b32.xlu0 %v545, 64
  %v548 = vpop.permute.xlu0 %547
  %v550 = vmul.f32 %v529, %v548
  %552 = vrot.lane.b32.xlu0 %v550, 32
  %v553 = vpop.permute.xlu0 %552
  %vm555 = vcmask 261126
  %556 = vst.msk [vmem:[#allocation2] sm:$0xc0] %vm555, %v553
  %v557 = vrot.slane %v550, 6
  %558 = vrot.lane.b32.xlu0 %v557, 32
  %v559 = vpop.permute.xlu0 %558
  %v560 = vsel %vm119, %v559, 0
  %562 = vmatprep.subr.mxu0 0.0
  %563 = vmatpush1.msra.mxu0 %v115
  %564 = vmatprep.subr.mxu0 0.0
  %565 = vmatpush1.msra.mxu0 %v116
  %566 = vmatprep.subr.mxu0 0.0
  %567 = vmatpush1.msra.mxu0 %v117
  %568 = vmatprep.subr.mxu0 0.0
  %569 = vmatpush1.msra.mxu0 %v118
  %570 = vmatprep.subr.mxu0 0.0
  %571 = vmatpush1.msra.mxu0 0.0
  %572 = vmatprep.subr.mxu0 0.0
  %573 = vmatpush1.msra.mxu0 0.0
  %574 = vmatprep.subr.mxu0 0.0
  %575 = vmatpush1.msra.mxu0 0.0
  %576 = vmatprep.subr.mxu0 0.0
  %577 = vmatpush1.msra.mxu0 0.0
  %578 = vmatprep.subr.mxu0 0.0
  %579 = vmatpush1.msra.mxu0 0.0
  %580 = vmatprep.subr.mxu0 0.0
  %581 = vmatpush1.msra.mxu0 0.0
  %582 = vmatprep.subr.mxu0 0.0
  %583 = vmatpush1.msra.mxu0 0.0
  %584 = vmatprep.subr.mxu0 0.0
  %585 = vmatpush1.msra.mxu0 0.0
  %586 = vmatprep.subr.mxu0 0.0
  %587 = vmatpush1.msra.mxu0 0.0
  %588 = vmatprep.subr.mxu0 0.0
  %589 = vmatpush1.msra.mxu0 0.0
  %590 = vmatprep.subr.mxu0 0.0
  %591 = vmatpush1.msra.mxu0 0.0
  %592 = vmatprep.subr.mxu0 0.0
  %593 = vmatpush1.msra.mxu0 0.0
  %594 = vmatprep.subr.mxu0 0.0
  %595 = vmatpush1.msra.mxu0 0.0
  %596 = vmatprep.subr.mxu0 0.0
  %597 = vmatpush1.msra.mxu0 0.0
  %598 = vmatprep.subr.mxu0 0.0
  %599 = vmatpush1.msra.mxu0 0.0
  %600 = vmatprep.subr.mxu0 0.0
  %601 = vmatpush1.msra.mxu0 0.0
  %602 = vmatprep.subr.mxu0 0.0
  %603 = vmatpush1.msra.mxu0 0.0
  %604 = vmatprep.subr.mxu0 0.0
  %605 = vmatpush1.msra.mxu0 0.0
  %606 = vmatprep.subr.mxu0 0.0
  %607 = vmatpush1.msra.mxu0 0.0
  %608 = vmatprep.subr.mxu0 0.0
  %609 = vmatpush1.msra.mxu0 0.0
  %610 = vmatprep.subr.mxu0 0.0
  %611 = vmatpush1.msra.mxu0 0.0
  %612 = vmatprep.subr.mxu0 0.0
  %613 = vmatpush1.msra.mxu0 0.0
  %614 = vmatprep.subr.mxu0 0.0
  %615 = vmatpush1.msra.mxu0 0.0
  %616 = vmatprep.subr.mxu0 0.0
  %617 = vmatpush1.msra.mxu0 0.0
  %618 = vmatprep.subr.mxu0 0.0
  %619 = vmatpush1.msra.mxu0 0.0
  %620 = vmatprep.subr.mxu0 0.0
  %621 = vmatpush1.msra.mxu0 0.0
  %622 = vmatprep.subr.mxu0 0.0
  %623 = vmatpush1.msra.mxu0 0.0
  %624 = vmatprep.subr.mxu0 0.0
  %625 = vmatpush1.msra.mxu0 0.0
  %626 = vmatprep.mubr.f32.mxu0 0.0
  %627 = vmatmul.mubr.f32.gmra.mrb[0].mxu0 %v560
  %v628 = vpop.f32.mrb[0].mxu0
  %v629 = vadd.f32 0.0, %v628
  %v630 = vpop.f32.mrb[0].mxu0
  %631 = vdwg.mxu0
  %v632 = vadd.f32 %v112, %v629
  %v633 = vxor.u32 %v632, 2147483648
  %v634 = vmul.f32 %v633, 1.442695
  %v635 = vpow.pop %v634
  %v636 = vadd.f32 %v635, 1.0
  %v637 = vrcp.pop %v636
  %v638 = vmul.f32 1.0, %v637
  %v639 = vtanh.pop %v632
  %v641 = vrot.slane %v544, 6
  %v643 = vmul.f32 %v638, %v641
  %645 = vrot.lane.b32.xlu0 %v639, 64
  %v646 = vpop.permute.xlu0 %645
  %v648 = vmul.f32 %v638, %v646
  %650 = vrot.lane.b32.xlu0 %v648, 32
  %v651 = vpop.permute.xlu0 %650
  %v653 = vadd.f32 %v643, %v651
  %v654 = vtanh.pop %v653
  %656 = vrot.lane.b32.xlu0 %v654, 64
  %v657 = vpop.permute.xlu0 %656
  %v659 = vmul.f32 %v638, %v657
  %661 = vrot.lane.b32.xlu0 %v659, 32
  %v662 = vpop.permute.xlu0 %661
  %664 = vst.msk [vmem:[#allocation2 + $0x8] sm:$0x3] %vm222, %v662
  %v665 = vsel %vm119, %v662, 0
  %667 = vmatprep.subr.mxu0 0.0
  %668 = vmatpush1.msra.mxu0 %v115
  %669 = vmatprep.subr.mxu0 0.0
  %670 = vmatpush1.msra.mxu0 %v116
  %671 = vmatprep.subr.mxu0 0.0
  %672 = vmatpush1.msra.mxu0 %v117
  %673 = vmatprep.subr.mxu0 0.0
  %674 = vmatpush1.msra.mxu0 %v118
  %675 = vmatprep.subr.mxu0 0.0
  %676 = vmatpush1.msra.mxu0 0.0
  %677 = vmatprep.subr.mxu0 0.0
  %678 = vmatpush1.msra.mxu0 0.0
  %679 = vmatprep.subr.mxu0 0.0
  %680 = vmatpush1.msra.mxu0 0.0
  %681 = vmatprep.subr.mxu0 0.0
  %682 = vmatpush1.msra.mxu0 0.0
  %683 = vmatprep.subr.mxu0 0.0
  %684 = vmatpush1.msra.mxu0 0.0
  %685 = vmatprep.subr.mxu0 0.0
  %686 = vmatpush1.msra.mxu0 0.0
  %687 = vmatprep.subr.mxu0 0.0
  %688 = vmatpush1.msra.mxu0 0.0
  %689 = vmatprep.subr.mxu0 0.0
  %690 = vmatpush1.msra.mxu0 0.0
  %691 = vmatprep.subr.mxu0 0.0
  %692 = vmatpush1.msra.mxu0 0.0
  %693 = vmatprep.subr.mxu0 0.0
  %694 = vmatpush1.msra.mxu0 0.0
  %695 = vmatprep.subr.mxu0 0.0
  %696 = vmatpush1.msra.mxu0 0.0
  %697 = vmatprep.subr.mxu0 0.0
  %698 = vmatpush1.msra.mxu0 0.0
  %699 = vmatprep.subr.mxu0 0.0
  %700 = vmatpush1.msra.mxu0 0.0
  %701 = vmatprep.subr.mxu0 0.0
  %702 = vmatpush1.msra.mxu0 0.0
  %703 = vmatprep.subr.mxu0 0.0
  %704 = vmatpush1.msra.mxu0 0.0
  %705 = vmatprep.subr.mxu0 0.0
  %706 = vmatpush1.msra.mxu0 0.0
  %707 = vmatprep.subr.mxu0 0.0
  %708 = vmatpush1.msra.mxu0 0.0
  %709 = vmatprep.subr.mxu0 0.0
  %710 = vmatpush1.msra.mxu0 0.0
  %711 = vmatprep.subr.mxu0 0.0
  %712 = vmatpush1.msra.mxu0 0.0
  %713 = vmatprep.subr.mxu0 0.0
  %714 = vmatpush1.msra.mxu0 0.0
  %715 = vmatprep.subr.mxu0 0.0
  %716 = vmatpush1.msra.mxu0 0.0
  %717 = vmatprep.subr.mxu0 0.0
  %718 = vmatpush1.msra.mxu0 0.0
  %719 = vmatprep.subr.mxu0 0.0
  %720 = vmatpush1.msra.mxu0 0.0
  %721 = vmatprep.subr.mxu0 0.0
  %722 = vmatpush1.msra.mxu0 0.0
  %723 = vmatprep.subr.mxu0 0.0
  %724 = vmatpush1.msra.mxu0 0.0
  %725 = vmatprep.subr.mxu0 0.0
  %726 = vmatpush1.msra.mxu0 0.0
  %727 = vmatprep.subr.mxu0 0.0
  %728 = vmatpush1.msra.mxu0 0.0
  %729 = vmatprep.subr.mxu0 0.0
  %730 = vmatpush1.msra.mxu0 0.0
  %731 = vmatprep.mubr.f32.mxu0 0.0
  %732 = vmatmul.mubr.f32.gmra.mrb[0].mxu0 %v665
  %v733 = vpop.f32.mrb[0].mxu0
  %v734 = vadd.f32 0.0, %v733
  %v735 = vpop.f32.mrb[0].mxu0
  %736 = vdwg.mxu0
  %v738 = vrot.slane %v734, 6
  %v740 = vadd.f32 %v112, %v738
  %v741 = vxor.u32 %v740, 2147483648
  %v742 = vmul.f32 %v741, 1.442695
  %v743 = vpow.pop %v742
  %v744 = vadd.f32 %v743, 1.0
  %v745 = vrcp.pop %v744
  %v746 = vmul.f32 1.0, %v745
  %v747 = vtanh.pop %v740
  %v749 = vrot.slane %v653, 6
  %v751 = vmul.f32 %v746, %v749
  %753 = vrot.lane.b32.xlu0 %v747, 64
  %v754 = vpop.permute.xlu0 %753
  %v756 = vmul.f32 %v746, %v754
  %758 = vrot.lane.b32.xlu0 %v756, 32
  %v759 = vpop.permute.xlu0 %758
  %v761 = vadd.f32 %v751, %v759
  %v762 = vtanh.pop %v761
  %764 = vrot.lane.b32.xlu0 %v762, 64
  %v765 = vpop.permute.xlu0 %764
  %v767 = vmul.f32 %v746, %v765
  %769 = vrot.lane.b32.xlu0 %v767, 32
  %v770 = vpop.permute.xlu0 %769
  %772 = vst.msk [vmem:[#allocation2 + $0x8] sm:$0xc] %vm331, %v770
  %v773 = vrot.slane %v767, 2
  %774 = vrot.lane.b32.xlu0 %v773, 32
  %v775 = vpop.permute.xlu0 %774
  %v776 = vsel %vm119, %v775, 0
  %778 = vmatprep.subr.mxu0 0.0
  %779 = vmatpush1.msra.mxu0 %v115
  %780 = vmatprep.subr.mxu0 0.0
  %781 = vmatpush1.msra.mxu0 %v116
  %782 = vmatprep.subr.mxu0 0.0
  %783 = vmatpush1.msra.mxu0 %v117
  %784 = vmatprep.subr.mxu0 0.0
  %785 = vmatpush1.msra.mxu0 %v118
  %786 = vmatprep.subr.mxu0 0.0
  %787 = vmatpush1.msra.mxu0 0.0
  %788 = vmatprep.subr.mxu0 0.0
  %789 = vmatpush1.msra.mxu0 0.0
  %790 = vmatprep.subr.mxu0 0.0
  %791 = vmatpush1.msra.mxu0 0.0
  %792 = vmatprep.subr.mxu0 0.0
  %793 = vmatpush1.msra.mxu0 0.0
  %794 = vmatprep.subr.mxu0 0.0
  %795 = vmatpush1.msra.mxu0 0.0
  %796 = vmatprep.subr.mxu0 0.0
  %797 = vmatpush1.msra.mxu0 0.0
  %798 = vmatprep.subr.mxu0 0.0
  %799 = vmatpush1.msra.mxu0 0.0
  %800 = vmatprep.subr.mxu0 0.0
  %801 = vmatpush1.msra.mxu0 0.0
  %802 = vmatprep.subr.mxu0 0.0
  %803 = vmatpush1.msra.mxu0 0.0
  %804 = vmatprep.subr.mxu0 0.0
  %805 = vmatpush1.msra.mxu0 0.0
  %806 = vmatprep.subr.mxu0 0.0
  %807 = vmatpush1.msra.mxu0 0.0
  %808 = vmatprep.subr.mxu0 0.0
  %809 = vmatpush1.msra.mxu0 0.0
  %810 = vmatprep.subr.mxu0 0.0
  %811 = vmatpush1.msra.mxu0 0.0
  %812 = vmatprep.subr.mxu0 0.0
  %813 = vmatpush1.msra.mxu0 0.0
  %814 = vmatprep.subr.mxu0 0.0
  %815 = vmatpush1.msra.mxu0 0.0
  %816 = vmatprep.subr.mxu0 0.0
  %817 = vmatpush1.msra.mxu0 0.0
  %818 = vmatprep.subr.mxu0 0.0
  %819 = vmatpush1.msra.mxu0 0.0
  %820 = vmatprep.subr.mxu0 0.0
  %821 = vmatpush1.msra.mxu0 0.0
  %822 = vmatprep.subr.mxu0 0.0
  %823 = vmatpush1.msra.mxu0 0.0
  %824 = vmatprep.subr.mxu0 0.0
  %825 = vmatpush1.msra.mxu0 0.0
  %826 = vmatprep.subr.mxu0 0.0
  %827 = vmatpush1.msra.mxu0 0.0
  %828 = vmatprep.subr.mxu0 0.0
  %829 = vmatpush1.msra.mxu0 0.0
  %830 = vmatprep.subr.mxu0 0.0
  %831 = vmatpush1.msra.mxu0 0.0
  %832 = vmatprep.subr.mxu0 0.0
  %833 = vmatpush1.msra.mxu0 0.0
  %834 = vmatprep.subr.mxu0 0.0
  %835 = vmatpush1.msra.mxu0 0.0
  %836 = vmatprep.subr.mxu0 0.0
  %837 = vmatpush1.msra.mxu0 0.0
  %838 = vmatprep.subr.mxu0 0.0
  %839 = vmatpush1.msra.mxu0 0.0
  %840 = vmatprep.subr.mxu0 0.0
  %841 = vmatpush1.msra.mxu0 0.0
  %842 = vmatprep.mubr.f32.mxu0 0.0
  %843 = vmatmul.mubr.f32.gmra.mrb[0].mxu0 %v776
  %v844 = vpop.f32.mrb[0].mxu0
  %v845 = vadd.f32 0.0, %v844
  %v846 = vpop.f32.mrb[0].mxu0
  %847 = vdwg.mxu0
  %v849 = vrot.slane %v845, 4
  %v851 = vadd.f32 %v112, %v849
  %v852 = vxor.u32 %v851, 2147483648
  %v853 = vmul.f32 %v852, 1.442695
  %v854 = vpow.pop %v853
  %v855 = vadd.f32 %v854, 1.0
  %v856 = vrcp.pop %v855
  %v857 = vmul.f32 1.0, %v856
  %v858 = vtanh.pop %v851
  %v860 = vrot.slane %v761, 6
  %v862 = vmul.f32 %v857, %v860
  %864 = vrot.lane.b32.xlu0 %v858, 64
  %v865 = vpop.permute.xlu0 %864
  %v867 = vmul.f32 %v857, %v865
  %869 = vrot.lane.b32.xlu0 %v867, 32
  %v870 = vpop.permute.xlu0 %869
  %v872 = vadd.f32 %v862, %v870
  %v873 = vtanh.pop %v872
  %875 = vrot.lane.b32.xlu0 %v873, 64
  %v876 = vpop.permute.xlu0 %875
  %v878 = vmul.f32 %v857, %v876
  %880 = vrot.lane.b32.xlu0 %v878, 32
  %v881 = vpop.permute.xlu0 %880
  %883 = vst.msk [vmem:[#allocation2 + $0x8] sm:$0x30] %vm443, %v881
  %v884 = vrot.slane %v878, 4
  %885 = vrot.lane.b32.xlu0 %v884, 32
  %v886 = vpop.permute.xlu0 %885
  %v887 = vsel %vm119, %v886, 0
  %889 = vmatprep.subr.mxu0 0.0
  %890 = vmatpush1.msra.mxu0 %v115
  %891 = vmatprep.subr.mxu0 0.0
  %892 = vmatpush1.msra.mxu0 %v116
  %893 = vmatprep.subr.mxu0 0.0
  %894 = vmatpush1.msra.mxu0 %v117
  %895 = vmatprep.subr.mxu0 0.0
  %896 = vmatpush1.msra.mxu0 %v118
  %897 = vmatprep.subr.mxu0 0.0
  %898 = vmatpush1.msra.mxu0 0.0
  %899 = vmatprep.subr.mxu0 0.0
  %900 = vmatpush1.msra.mxu0 0.0
  %901 = vmatprep.subr.mxu0 0.0
  %902 = vmatpush1.msra.mxu0 0.0
  %903 = vmatprep.subr.mxu0 0.0
  %904 = vmatpush1.msra.mxu0 0.0
  %905 = vmatprep.subr.mxu0 0.0
  %906 = vmatpush1.msra.mxu0 0.0
  %907 = vmatprep.subr.mxu0 0.0
  %908 = vmatpush1.msra.mxu0 0.0
  %909 = vmatprep.subr.mxu0 0.0
  %910 = vmatpush1.msra.mxu0 0.0
  %911 = vmatprep.subr.mxu0 0.0
  %912 = vmatpush1.msra.mxu0 0.0
  %913 = vmatprep.subr.mxu0 0.0
  %914 = vmatpush1.msra.mxu0 0.0
  %915 = vmatprep.subr.mxu0 0.0
  %916 = vmatpush1.msra.mxu0 0.0
  %917 = vmatprep.subr.mxu0 0.0
  %918 = vmatpush1.msra.mxu0 0.0
  %919 = vmatprep.subr.mxu0 0.0
  %920 = vmatpush1.msra.mxu0 0.0
  %921 = vmatprep.subr.mxu0 0.0
  %922 = vmatpush1.msra.mxu0 0.0
  %923 = vmatprep.subr.mxu0 0.0
  %924 = vmatpush1.msra.mxu0 0.0
  %925 = vmatprep.subr.mxu0 0.0
  %926 = vmatpush1.msra.mxu0 0.0
  %927 = vmatprep.subr.mxu0 0.0
  %928 = vmatpush1.msra.mxu0 0.0
  %929 = vmatprep.subr.mxu0 0.0
  %930 = vmatpush1.msra.mxu0 0.0
  %931 = vmatprep.subr.mxu0 0.0
  %932 = vmatpush1.msra.mxu0 0.0
  %933 = vmatprep.subr.mxu0 0.0
  %934 = vmatpush1.msra.mxu0 0.0
  %935 = vmatprep.subr.mxu0 0.0
  %936 = vmatpush1.msra.mxu0 0.0
  %937 = vmatprep.subr.mxu0 0.0
  %938 = vmatpush1.msra.mxu0 0.0
  %939 = vmatprep.subr.mxu0 0.0
  %940 = vmatpush1.msra.mxu0 0.0
  %941 = vmatprep.subr.mxu0 0.0
  %942 = vmatpush1.msra.mxu0 0.0
  %943 = vmatprep.subr.mxu0 0.0
  %944 = vmatpush1.msra.mxu0 0.0
  %945 = vmatprep.subr.mxu0 0.0
  %946 = vmatpush1.msra.mxu0 0.0
  %947 = vmatprep.subr.mxu0 0.0
  %948 = vmatpush1.msra.mxu0 0.0
  %949 = vmatprep.subr.mxu0 0.0
  %950 = vmatpush1.msra.mxu0 0.0
  %951 = vmatprep.subr.mxu0 0.0
  %952 = vmatpush1.msra.mxu0 0.0
  %953 = vmatprep.mubr.f32.mxu0 0.0
  %954 = vmatmul.mubr.f32.gmra.mrb[0].mxu0 %v887
  %v955 = vpop.f32.mrb[0].mxu0
  %v956 = vadd.f32 0.0, %v955
  %v957 = vpop.f32.mrb[0].mxu0
  %958 = vdwg.mxu0
  %v960 = vrot.slane %v956, 2
  %v962 = vadd.f32 %v112, %v960
  %v963 = vxor.u32 %v962, 2147483648
  %v964 = vmul.f32 %v963, 1.442695
  %v965 = vpow.pop %v964
  %v966 = vadd.f32 %v965, 1.0
  %v967 = vrcp.pop %v966
  %v968 = vmul.f32 1.0, %v967
  %v969 = vtanh.pop %v962
  %v971 = vrot.slane %v872, 6
  %v973 = vmul.f32 %v968, %v971
  %975 = vrot.lane.b32.xlu0 %v969, 64
  %v976 = vpop.permute.xlu0 %975
  %v978 = vmul.f32 %v968, %v976
  %980 = vrot.lane.b32.xlu0 %v978, 32
  %v981 = vpop.permute.xlu0 %980
  %v983 = vadd.f32 %v973, %v981
  %v984 = vtanh.pop %v983
  %986 = vrot.lane.b32.xlu0 %v984, 64
  %v987 = vpop.permute.xlu0 %986
  %v989 = vmul.f32 %v968, %v987
  %991 = vrot.lane.b32.xlu0 %v989, 32
  %v992 = vpop.permute.xlu0 %991
  %994 = vst.msk [vmem:[#allocation2 + $0x8] sm:$0xc0] %vm555, %v992
  %v995 = vld [vmem:[#allocation2] sm:$0xff]
  %v996 = vld [vmem:[#allocation2 + $0x8] sm:$0xff]
  %v997 = vld [vmem:[%s4] sm:$0xff]
  %v998 = vld [vmem:[%s4 + $0x8] sm:$0xff]
  %v999 = vld [vmem:[%s4 + $0x10] sm:$0xff]
  %v1000 = vld [vmem:[%s4 + $0x18] sm:$0xff]
  %v1001 = vld [vmem:[%s5] sm:$0x1]
  %v1003 = vlaneseq
  %v1004 = vshrl.u32 %v1003, 7
  %v1005 = vsub.s32 0, %v1004
  %v1006 = vrot.slane %v1001, %v1005
  %v1009 = vsel %vm119, %v995, 0
  %v1012 = vsel %vm119, %v996, 0
  %1014 = vmatprep.subr.mxu0 0.0
  %1015 = vmatpush1.msra.mxu0 %v997
  %1016 = vmatprep.subr.mxu0 0.0
  %1017 = vmatpush1.msra.mxu0 %v998
  %1018 = vmatprep.subr.mxu0 0.0
  %1019 = vmatpush1.msra.mxu0 %v999
  %1020 = vmatprep.subr.mxu0 0.0
  %1021 = vmatpush1.msra.mxu0 %v1000
  %1022 = vmatprep.subr.mxu0 0.0
  %1023 = vmatpush1.msra.mxu0 0.0
  %1024 = vmatprep.subr.mxu0 0.0
  %1025 = vmatpush1.msra.mxu0 0.0
  %1026 = vmatprep.subr.mxu0 0.0
  %1027 = vmatpush1.msra.mxu0 0.0
  %1028 = vmatprep.subr.mxu0 0.0
  %1029 = vmatpush1.msra.mxu0 0.0
  %1030 = vmatprep.subr.mxu0 0.0
  %1031 = vmatpush1.msra.mxu0 0.0
  %1032 = vmatprep.subr.mxu0 0.0
  %1033 = vmatpush1.msra.mxu0 0.0
  %1034 = vmatprep.subr.mxu0 0.0
  %1035 = vmatpush1.msra.mxu0 0.0
  %1036 = vmatprep.subr.mxu0 0.0
  %1037 = vmatpush1.msra.mxu0 0.0
  %1038 = vmatprep.subr.mxu0 0.0
  %1039 = vmatpush1.msra.mxu0 0.0
  %1040 = vmatprep.subr.mxu0 0.0
  %1041 = vmatpush1.msra.mxu0 0.0
  %1042 = vmatprep.subr.mxu0 0.0
  %1043 = vmatpush1.msra.mxu0 0.0
  %1044 = vmatprep.subr.mxu0 0.0
  %1045 = vmatpush1.msra.mxu0 0.0
  %1046 = vmatprep.subr.mxu0 0.0
  %1047 = vmatpush1.msra.mxu0 0.0
  %1048 = vmatprep.subr.mxu0 0.0
  %1049 = vmatpush1.msra.mxu0 0.0
  %1050 = vmatprep.subr.mxu0 0.0
  %1051 = vmatpush1.msra.mxu0 0.0
  %1052 = vmatprep.subr.mxu0 0.0
  %1053 = vmatpush1.msra.mxu0 0.0
  %1054 = vmatprep.subr.mxu0 0.0
  %1055 = vmatpush1.msra.mxu0 0.0
  %1056 = vmatprep.subr.mxu0 0.0
  %1057 = vmatpush1.msra.mxu0 0.0
  %1058 = vmatprep.subr.mxu0 0.0
  %1059 = vmatpush1.msra.mxu0 0.0
  %1060 = vmatprep.subr.mxu0 0.0
  %1061 = vmatpush1.msra.mxu0 0.0
  %1062 = vmatprep.subr.mxu0 0.0
  %1063 = vmatpush1.msra.mxu0 0.0
  %1064 = vmatprep.subr.mxu0 0.0
  %1065 = vmatpush1.msra.mxu0 0.0
  %1066 = vmatprep.subr.mxu0 0.0
  %1067 = vmatpush1.msra.mxu0 0.0
  %1068 = vmatprep.subr.mxu0 0.0
  %1069 = vmatpush1.msra.mxu0 0.0
  %1070 = vmatprep.subr.mxu0 0.0
  %1071 = vmatpush1.msra.mxu0 0.0
  %1072 = vmatprep.subr.mxu0 0.0
  %1073 = vmatpush1.msra.mxu0 0.0
  %1074 = vmatprep.subr.mxu0 0.0
  %1075 = vmatpush1.msra.mxu0 0.0
  %1076 = vmatprep.subr.mxu0 0.0
  %1077 = vmatpush1.msra.mxu0 0.0
  %1078 = vmatprep.mubr.f32.mxu0 0.0
  %1079 = vmatmul.mubr.f32.gmra.mrb[0].mxu0 %v1009
  %v1080 = vpop.f32.mrb[0].mxu0
  %v1081 = vadd.f32 %v1006, %v1080
  %v1082 = vpop.f32.mrb[0].mxu0
  %1083 = vmatprep.mubr.f32.mxu0 0.0
  %1084 = vmatmul.mubr.f32.gmra.mrb[0].mxu0 %v1012
  %v1085 = vpop.f32.mrb[0].mxu0
  %v1086 = vadd.f32 %v1006, %v1085
  %v1087 = vpop.f32.mrb[0].mxu0
  %1088 = vdwg.mxu0
  %v1089 = vlaneseq
  %v1090 = vand.u32 %v1089, 127
  %vm1091 = vcmp.eq.s32.totalorder %v1090, 1
  %v1092 = vmax.f32 %v1081, -2.9957323
  %v1093 = vmax.f32 %v1086, -2.9957323
  %v1094 = vmin.f32 %v1092, 11.512925
  %v1095 = vmin.f32 %v1093, 11.512925
  %v1096 = vsel %vm1091, %v1094, %v1081
  %v1097 = vsel %vm1091, %v1095, %v1086
  %vm1098 = vcmask 15360
  %1099 = vst.msk [vmem:[%s6] sm:$0xff] %vm1098, %v1096
  %1100 = vst.msk [vmem:[%s6 + $0x8] sm:$0xff] %vm1098, %v1097
  // Predicated region
  $region26: #{tpu_custom_call.1} parent=0 // pred_check
    _
  $region27: #{tpu_custom_call.1} parent=0 // pred_check_branch
    %1102 = sbr.rel (0) target = $region29
  $region28: #{tpu_custom_call.1} parent=0 // pred_region
    _
  $region29: #{tpu_custom_call.1} parent=0 // pred_fallthru
    _
  // Predicated region
  $region30: #{tpu_custom_call.1} parent=0 // pred_check
    _
  $region31: #{tpu_custom_call.1} parent=0 // pred_check_branch
    %1104 = sbr.rel (0) target = $region33
  $region32: #{tpu_custom_call.1} parent=0 // pred_region
    _
  $region33: #{tpu_custom_call.1} parent=0 // pred_fallthru
    _

</llo_original>
